<compile_context>
chip_gen: v7x
topology: tpu7x:2x2x1
jax: 0.10.0
libtpu: 0.0.40
codegen_flags: <defaults>
</compile_context>

<pallas_src>
import jax
import jax.numpy as jnp
from jax.experimental import pallas as pl
from jax.experimental.pallas import tpu as pltpu

HIDDEN = 20
BATCH = 5        # torch.randn(5, 3, 20) drawn inside GRUModel.forward
BATCH_PAD = 8    # pad batch to one full sublane tile
SEQ = 3
LAYERS = 2
GATE_PITCH = 128  # lane stride per gate in the packed weight layout


# ---------------------------------------------------------------- kernel ----

def fused_forward_kernel(xh_ref, w_ref, b_ref, out_ref):
    """Entire forward (2 GRU passes x 2 layers x 3 steps + Linear) in one call.

    xh_ref : (T*BP + L*BP, H) f32   rows [0, T*BP): time-major padded x,
                                    rows [T*BP, ...): padded h0 per layer
    w_ref  : (2L, H, 3*GP)    bf16  rows 0..L-1: W_ih packed, L..2L-1: W_hh packed;
                                    gate g occupies lanes [g*GP, g*GP+H)
    b_ref  : (2L+2, 3*GP)     f32   rows 0..L-1: b_ih (+ folded b_hr/b_hz),
                                    rows L..2L-1: b_hn (lanes 0:H),
                                    row 2L: Linear weight, row 2L+1: Linear bias
    out_ref: (BATCH, 1)       f32   predictions
    """
    H, BP, T, L, GP = HIDDEN, BATCH_PAD, SEQ, LAYERS, GATE_PITCH

    b = b_ref[...]  # (2L+2, 3GP) f32 — tiny, keep resident

    def gru_pass(layer_in_flat, h_init):
        """2-layer nn.GRU(20,20,2). layer_in_flat: (T*BP, H) f32.
        h_init: list of (BP, H) per layer, or None => zero initial hidden.
        Returns (top-layer outputs (T*BP, H), final hidden of top layer (BP, H))."""
        cur = layer_in_flat
        h = None
        for l in range(L):
            wih = w_ref[l]          # (H, 3GP) bf16
            whh = w_ref[L + l]      # (H, 3GP) bf16
            bi = b[l:l + 1, :]      # (1, 3GP): b_ir+b_hr | b_iz+b_hz | b_in (folded)
            bhn = jnp.broadcast_to(b[L + l:L + l + 1, 0:H], (BP, H))  # hoisted

            # Hoisted input projection: ONE packed matmul covers all T steps & 3 gates.
            gi_all = jnp.dot(cur.astype(jnp.bfloat16), wih,
                             preferred_element_type=jnp.float32) + bi  # (T*BP, 3GP)

            h = None if h_init is None else h_init[l]
            outs = []
            for t in range(T):                         # static, fully unrolled
                gi = gi_all[t * BP:(t + 1) * BP, :]    # aligned 8-sublane slice
                if h is None:
                    # Known-zero hidden (pass 2, t == 0): h @ W_hh == 0, skip matmul.
                    r = jax.nn.sigmoid(gi[:, 0:H])
                    z = jax.nn.sigmoid(gi[:, GP:GP + H])
                    n = jnp.tanh(gi[:, 2 * GP:2 * GP + H] + r * bhn)
                    h = (1.0 - z) * n
                else:
                    gh = jnp.dot(h.astype(jnp.bfloat16), whh,
                                 preferred_element_type=jnp.float32)  # (BP, 3GP)
                    r = jax.nn.sigmoid(gi[:, 0:H] + gh[:, 0:H])
                    z = jax.nn.sigmoid(gi[:, GP:GP + H] + gh[:, GP:GP + H])
                    n = jnp.tanh(gi[:, 2 * GP:2 * GP + H]
                                 + r * (gh[:, 2 * GP:2 * GP + H] + bhn))
                    h = (1.0 - z) * n + z * h
                outs.append(h)
            # Each piece is exactly one 8-sublane tile -> tile-aligned assembly.
            cur = jnp.concatenate(outs, axis=0)        # (T*BP, H) feeds next layer
        return cur, h

    x_flat = xh_ref[0:T * BP, :]                                        # (24, 20)
    h0 = [xh_ref[T * BP + l * BP:T * BP + (l + 1) * BP, :] for l in range(L)]

    # Pass 1: gru(randn_input, randn_h0) -> top-layer outputs.
    out1, _ = gru_pass(x_flat, h0)

    # torch.split(dim=1) + torch.cat(dim=1) identity -> dropped.

    # Pass 2: same GRU on pass-1 outputs, zero initial hidden; keep h[-1].
    _, h_last = gru_pass(out1, None)

    # Linear(20 -> 1) as VPU multiply + lane reduction (no tail MXU round trip).
    lin_w = b[2 * L:2 * L + 1, 0:H]          # (1, H)
    lin_b = b[2 * L + 1:2 * L + 2, 0:1]      # (1, 1)
    h5 = h_last[0:BATCH, :]                  # drop batch padding rows
    out_ref[...] = jnp.sum(h5 * lin_w, axis=-1, keepdims=True) + lin_b


# --------------------------------------------------------------- wrapper ----

def fused_forward(xh, w_packed, b_packed):
    return pl.pallas_call(
        fused_forward_kernel,
        out_shape=jax.ShapeDtypeStruct((BATCH, 1), jnp.float32),
        in_specs=[
            pl.BlockSpec(memory_space=pltpu.MemorySpace.VMEM),
            pl.BlockSpec(memory_space=pltpu.MemorySpace.VMEM),
            pl.BlockSpec(memory_space=pltpu.MemorySpace.VMEM),
        ],
        out_specs=pl.BlockSpec(memory_space=pltpu.MemorySpace.VMEM),
    )(xh, w_packed, b_packed)


# ------------------------------------------------------------- parameters ---

def init_params(key):
    H, L, GP = HIDDEN, LAYERS, GATE_PITCH
    bound = 1.0 / (H ** 0.5)
    ks = jax.random.split(key, 6)
    u = lambda k, shape: jax.random.uniform(k, shape, jnp.float32, -bound, bound)

    # nn.GRU(20,20,2) parameters, gate order (r, z, n), stored pre-transposed (in, out).
    wih = u(ks[0], (L, 3, H, H))
    whh = u(ks[1], (L, 3, H, H))
    bih = u(ks[2], (L, 3, H))
    bhh = u(ks[3], (L, 3, H))
    lin_w = u(ks[4], (H,))     # nn.Linear(20, 1) weight (as a row)
    lin_b = u(ks[5], (1,))

    # Packed weights: (2L, H, 3*GP) bf16, gate g in lanes [g*GP, g*GP+H).
    def pack(w):  # (L,3,H,H) -> (L,H,3*GP)
        wp = jnp.pad(w, ((0, 0), (0, 0), (0, 0), (0, GP - H)))
        return jnp.transpose(wp, (0, 2, 1, 3)).reshape(L, H, 3 * GP)

    W = jnp.concatenate([pack(wih), pack(whh)], axis=0).astype(jnp.bfloat16)

    # Bias / linear buffer: (2L+2, 3*GP) f32.
    # Fold b_hr / b_hz into the input bias; b_hn MUST stay inside r*(...).
    bi_fold = jnp.stack([bih[:, 0] + bhh[:, 0],
                         bih[:, 1] + bhh[:, 1],
                         bih[:, 2]], axis=1)                           # (L, 3, H)
    bi_rows = jnp.pad(bi_fold, ((0, 0), (0, 0), (0, GP - H))).reshape(L, 3 * GP)
    bhn_rows = jnp.pad(bhh[:, 2], ((0, 0), (0, 3 * GP - H)))           # (L, 3GP)
    linw_row = jnp.pad(lin_w[None, :], ((0, 0), (0, 3 * GP - H)))      # (1, 3GP)
    linb_row = jnp.pad(lin_b[None, :], ((0, 0), (0, 3 * GP - 1)))      # (1, 3GP)
    B = jnp.concatenate([bi_rows, bhn_rows, linw_row, linb_row], axis=0)

    return {"W": W, "B": B}


# ----------------------------------------------------------------- forward --

def time_series_prediction_forward(input_seq, params, rng_key):
    # GRUCellModel(input_seq) is computed in the PyTorch code, but
    # GRUModel.forward discards its input, so it never affects the output.
    del input_seq  # intentionally unused — dead branch w.r.t. the module output

    # GRUModel.forward draws fresh "randn" input / h0.
    # TODO(synk): torch RNG bit-parity is not reproducible; jax.random used instead.
    k1, k2 = jax.random.split(rng_key)
    rand_input = jax.random.normal(k1, (BATCH, SEQ, HIDDEN), jnp.float32)  # (5,3,20)
    h0 = jax.random.normal(k2, (LAYERS, BATCH, HIDDEN), jnp.float32)       # (2,5,20)

    # Pack activations into one tile-friendly buffer: time-major, batch padded
    # 5 -> 8, flattened so every per-timestep slice is an aligned 8-sublane tile.
    x_tbh = jnp.transpose(rand_input, (1, 0, 2))                           # (3,5,20)
    x_pad = jnp.pad(x_tbh, ((0, 0), (0, BATCH_PAD - BATCH), (0, 0)))
    h0_pad = jnp.pad(h0, ((0, 0), (0, BATCH_PAD - BATCH), (0, 0)))
    xh = jnp.concatenate(
        [x_pad.reshape(SEQ * BATCH_PAD, HIDDEN),
         h0_pad.reshape(LAYERS * BATCH_PAD, HIDDEN)], axis=0)              # (40, 20)

    return fused_forward(xh, params["W"], params["B"])                     # (5, 1)


# -------------------------------------------------------------------- main --

if __name__ == "__main__":
    root = jax.random.PRNGKey(0)
    k_in, k_params, k_fwd = jax.random.split(root, 3)

    # Matches the module's hardcoded input: torch.randn(24, 10, 9).
    input_seq = jax.random.normal(k_in, (24, 10, 9), jnp.float32)
    params = init_params(k_params)

    fwd = jax.jit(time_series_prediction_forward)
    predictions = fwd(input_seq, params, k_fwd)
    predictions = jax.block_until_ready(predictions)

    assert predictions.shape == (BATCH, 1), predictions.shape
    assert predictions.dtype == jnp.float32
    assert bool(jnp.all(jnp.isfinite(predictions)))
    print("KERNEL_OK")
</pallas_src>

<mosaic_0001>
module attributes {stable_mosaic.version = 11 : i64} {
  func.func @fused_forward_kernel(%arg0: memref<40x20xf32, #tpu.memory_space<vmem>>, %arg1: memref<4x20x384xbf16, #tpu.memory_space<vmem>>, %arg2: memref<6x384xf32, #tpu.memory_space<vmem>>, %arg3: memref<5x1xf32, #tpu.memory_space<vmem>>) attributes {dimension_semantics = [], scalar_prefetch = 0 : i64, scratch_operands = 0 : i64, tpu.core_type = #tpu.core_type<tc>} {
    %c0 = arith.constant 0 : index
    %c0_0 = arith.constant 0 : index
    %0 = vector.load %arg2[%c0, %c0_0] : memref<6x384xf32, #tpu.memory_space<vmem>>, vector<6x384xf32>
    %c0_1 = arith.constant 0 : index
    %c0_2 = arith.constant 0 : index
    %1 = vector.load %arg0[%c0_1, %c0_2] : memref<40x20xf32, #tpu.memory_space<vmem>>, vector<24x20xf32>
    %c24 = arith.constant 24 : index
    %c0_3 = arith.constant 0 : index
    %2 = vector.load %arg0[%c24, %c0_3] : memref<40x20xf32, #tpu.memory_space<vmem>>, vector<8x20xf32>
    %c32 = arith.constant 32 : index
    %c0_4 = arith.constant 0 : index
    %3 = vector.load %arg0[%c32, %c0_4] : memref<40x20xf32, #tpu.memory_space<vmem>>, vector<8x20xf32>
    %c0_5 = arith.constant 0 : index
    %c0_6 = arith.constant 0 : index
    %c0_7 = arith.constant 0 : index
    %4 = vector.load %arg1[%c0_5, %c0_6, %c0_7] : memref<4x20x384xbf16, #tpu.memory_space<vmem>>, vector<1x20x384xbf16>
    %5 = vector.shape_cast %4 : vector<1x20x384xbf16> to vector<20x384xbf16>
    %c2 = arith.constant 2 : index
    %c0_8 = arith.constant 0 : index
    %c0_9 = arith.constant 0 : index
    %6 = vector.load %arg1[%c2, %c0_8, %c0_9] : memref<4x20x384xbf16, #tpu.memory_space<vmem>>, vector<1x20x384xbf16>
    %7 = vector.shape_cast %6 : vector<1x20x384xbf16> to vector<20x384xbf16>
    %8 = vector.extract_strided_slice %0 {offsets = [0, 0], sizes = [1, 384], strides = [1, 1]} : vector<6x384xf32> to vector<1x384xf32>
    %9 = vector.extract_strided_slice %0 {offsets = [2, 0], sizes = [1, 20], strides = [1, 1]} : vector<6x384xf32> to vector<1x20xf32>
    %10 = vector.shape_cast %9 : vector<1x20xf32> to vector<1x20xf32>
    %11 = vector.broadcast %10 : vector<1x20xf32> to vector<8x20xf32>
    %12 = arith.truncf %1 : vector<24x20xf32> to vector<24x20xbf16>
    %cst = arith.constant dense<0.000000e+00> : vector<24x384xf32>
    %13 = tpu.matmul %12, %5, %cst {dimension_numbers = #tpu.dot_dimension_numbers<[1], [0], [0], [1], [0, 0, 1, 1], [], []>} : vector<24x20xbf16>, vector<20x384xbf16>, vector<24x384xf32> -> vector<24x384xf32>
    %14 = vector.broadcast %8 : vector<1x384xf32> to vector<24x384xf32>
    %15 = arith.addf %13, %14 : vector<24x384xf32>
    %16 = vector.extract_strided_slice %15 {offsets = [0, 0], sizes = [8, 384], strides = [1, 1]} : vector<24x384xf32> to vector<8x384xf32>
    %17 = arith.truncf %2 : vector<8x20xf32> to vector<8x20xbf16>
    %cst_10 = arith.constant dense<0.000000e+00> : vector<8x384xf32>
    %18 = tpu.matmul %17, %7, %cst_10 {dimension_numbers = #tpu.dot_dimension_numbers<[1], [0], [0], [1], [0, 0, 1, 1], [], []>} : vector<8x20xbf16>, vector<20x384xbf16>, vector<8x384xf32> -> vector<8x384xf32>
    %19 = vector.extract_strided_slice %16 {offsets = [0, 0], sizes = [8, 20], strides = [1, 1]} : vector<8x384xf32> to vector<8x20xf32>
    %20 = vector.extract_strided_slice %18 {offsets = [0, 0], sizes = [8, 20], strides = [1, 1]} : vector<8x384xf32> to vector<8x20xf32>
    %21 = arith.addf %19, %20 : vector<8x20xf32>
    %22 = arith.negf %21 : vector<8x20xf32>
    %23 = math.exp %22 : vector<8x20xf32>
    %cst_11 = arith.constant 1.000000e+00 : f32
    %24 = vector.broadcast %cst_11 : f32 to vector<8x20xf32>
    %25 = arith.addf %24, %23 : vector<8x20xf32>
    %26 = arith.divf %24, %25 : vector<8x20xf32>
    %27 = vector.extract_strided_slice %16 {offsets = [0, 128], sizes = [8, 20], strides = [1, 1]} : vector<8x384xf32> to vector<8x20xf32>
    %28 = vector.extract_strided_slice %18 {offsets = [0, 128], sizes = [8, 20], strides = [1, 1]} : vector<8x384xf32> to vector<8x20xf32>
    %29 = arith.addf %27, %28 : vector<8x20xf32>
    %30 = arith.negf %29 : vector<8x20xf32>
    %31 = math.exp %30 : vector<8x20xf32>
    %cst_12 = arith.constant 1.000000e+00 : f32
    %32 = vector.broadcast %cst_12 : f32 to vector<8x20xf32>
    %33 = arith.addf %32, %31 : vector<8x20xf32>
    %34 = arith.divf %32, %33 : vector<8x20xf32>
    %35 = vector.extract_strided_slice %16 {offsets = [0, 256], sizes = [8, 20], strides = [1, 1]} : vector<8x384xf32> to vector<8x20xf32>
    %36 = vector.extract_strided_slice %18 {offsets = [0, 256], sizes = [8, 20], strides = [1, 1]} : vector<8x384xf32> to vector<8x20xf32>
    %37 = arith.addf %36, %11 : vector<8x20xf32>
    %38 = arith.mulf %26, %37 : vector<8x20xf32>
    %39 = arith.addf %35, %38 : vector<8x20xf32>
    %40 = math.tanh %39 : vector<8x20xf32>
    %cst_13 = arith.constant 1.000000e+00 : f32
    %41 = vector.broadcast %cst_13 : f32 to vector<8x20xf32>
    %42 = arith.subf %41, %34 : vector<8x20xf32>
    %43 = arith.mulf %42, %40 : vector<8x20xf32>
    %44 = arith.mulf %34, %2 : vector<8x20xf32>
    %45 = arith.addf %43, %44 : vector<8x20xf32>
    %46 = vector.extract_strided_slice %15 {offsets = [8, 0], sizes = [8, 384], strides = [1, 1]} : vector<24x384xf32> to vector<8x384xf32>
    %47 = arith.truncf %45 : vector<8x20xf32> to vector<8x20xbf16>
    %cst_14 = arith.constant dense<0.000000e+00> : vector<8x384xf32>
    %48 = tpu.matmul %47, %7, %cst_14 {dimension_numbers = #tpu.dot_dimension_numbers<[1], [0], [0], [1], [0, 0, 1, 1], [], []>} : vector<8x20xbf16>, vector<20x384xbf16>, vector<8x384xf32> -> vector<8x384xf32>
    %49 = vector.extract_strided_slice %46 {offsets = [0, 0], sizes = [8, 20], strides = [1, 1]} : vector<8x384xf32> to vector<8x20xf32>
    %50 = vector.extract_strided_slice %48 {offsets = [0, 0], sizes = [8, 20], strides = [1, 1]} : vector<8x384xf32> to vector<8x20xf32>
    %51 = arith.addf %49, %50 : vector<8x20xf32>
    %52 = arith.negf %51 : vector<8x20xf32>
    %53 = math.exp %52 : vector<8x20xf32>
    %cst_15 = arith.constant 1.000000e+00 : f32
    %54 = vector.broadcast %cst_15 : f32 to vector<8x20xf32>
    %55 = arith.addf %54, %53 : vector<8x20xf32>
    %56 = arith.divf %54, %55 : vector<8x20xf32>
    %57 = vector.extract_strided_slice %46 {offsets = [0, 128], sizes = [8, 20], strides = [1, 1]} : vector<8x384xf32> to vector<8x20xf32>
    %58 = vector.extract_strided_slice %48 {offsets = [0, 128], sizes = [8, 20], strides = [1, 1]} : vector<8x384xf32> to vector<8x20xf32>
    %59 = arith.addf %57, %58 : vector<8x20xf32>
    %60 = arith.negf %59 : vector<8x20xf32>
    %61 = math.exp %60 : vector<8x20xf32>
    %cst_16 = arith.constant 1.000000e+00 : f32
    %62 = vector.broadcast %cst_16 : f32 to vector<8x20xf32>
    %63 = arith.addf %62, %61 : vector<8x20xf32>
    %64 = arith.divf %62, %63 : vector<8x20xf32>
    %65 = vector.extract_strided_slice %46 {offsets = [0, 256], sizes = [8, 20], strides = [1, 1]} : vector<8x384xf32> to vector<8x20xf32>
    %66 = vector.extract_strided_slice %48 {offsets = [0, 256], sizes = [8, 20], strides = [1, 1]} : vector<8x384xf32> to vector<8x20xf32>
    %67 = arith.addf %66, %11 : vector<8x20xf32>
    %68 = arith.mulf %56, %67 : vector<8x20xf32>
    %69 = arith.addf %65, %68 : vector<8x20xf32>
    %70 = math.tanh %69 : vector<8x20xf32>
    %cst_17 = arith.constant 1.000000e+00 : f32
    %71 = vector.broadcast %cst_17 : f32 to vector<8x20xf32>
    %72 = arith.subf %71, %64 : vector<8x20xf32>
    %73 = arith.mulf %72, %70 : vector<8x20xf32>
    %74 = arith.mulf %64, %45 : vector<8x20xf32>
    %75 = arith.addf %73, %74 : vector<8x20xf32>
    %76 = vector.extract_strided_slice %15 {offsets = [16, 0], sizes = [8, 384], strides = [1, 1]} : vector<24x384xf32> to vector<8x384xf32>
    %77 = arith.truncf %75 : vector<8x20xf32> to vector<8x20xbf16>
    %cst_18 = arith.constant dense<0.000000e+00> : vector<8x384xf32>
    %78 = tpu.matmul %77, %7, %cst_18 {dimension_numbers = #tpu.dot_dimension_numbers<[1], [0], [0], [1], [0, 0, 1, 1], [], []>} : vector<8x20xbf16>, vector<20x384xbf16>, vector<8x384xf32> -> vector<8x384xf32>
    %79 = vector.extract_strided_slice %76 {offsets = [0, 0], sizes = [8, 20], strides = [1, 1]} : vector<8x384xf32> to vector<8x20xf32>
    %80 = vector.extract_strided_slice %78 {offsets = [0, 0], sizes = [8, 20], strides = [1, 1]} : vector<8x384xf32> to vector<8x20xf32>
    %81 = arith.addf %79, %80 : vector<8x20xf32>
    %82 = arith.negf %81 : vector<8x20xf32>
    %83 = math.exp %82 : vector<8x20xf32>
    %cst_19 = arith.constant 1.000000e+00 : f32
    %84 = vector.broadcast %cst_19 : f32 to vector<8x20xf32>
    %85 = arith.addf %84, %83 : vector<8x20xf32>
    %86 = arith.divf %84, %85 : vector<8x20xf32>
    %87 = vector.extract_strided_slice %76 {offsets = [0, 128], sizes = [8, 20], strides = [1, 1]} : vector<8x384xf32> to vector<8x20xf32>
    %88 = vector.extract_strided_slice %78 {offsets = [0, 128], sizes = [8, 20], strides = [1, 1]} : vector<8x384xf32> to vector<8x20xf32>
    %89 = arith.addf %87, %88 : vector<8x20xf32>
    %90 = arith.negf %89 : vector<8x20xf32>
    %91 = math.exp %90 : vector<8x20xf32>
    %cst_20 = arith.constant 1.000000e+00 : f32
    %92 = vector.broadcast %cst_20 : f32 to vector<8x20xf32>
    %93 = arith.addf %92, %91 : vector<8x20xf32>
    %94 = arith.divf %92, %93 : vector<8x20xf32>
    %95 = vector.extract_strided_slice %76 {offsets = [0, 256], sizes = [8, 20], strides = [1, 1]} : vector<8x384xf32> to vector<8x20xf32>
    %96 = vector.extract_strided_slice %78 {offsets = [0, 256], sizes = [8, 20], strides = [1, 1]} : vector<8x384xf32> to vector<8x20xf32>
    %97 = arith.addf %96, %11 : vector<8x20xf32>
    %98 = arith.mulf %86, %97 : vector<8x20xf32>
    %99 = arith.addf %95, %98 : vector<8x20xf32>
    %100 = math.tanh %99 : vector<8x20xf32>
    %cst_21 = arith.constant 1.000000e+00 : f32
    %101 = vector.broadcast %cst_21 : f32 to vector<8x20xf32>
    %102 = arith.subf %101, %94 : vector<8x20xf32>
    %103 = arith.mulf %102, %100 : vector<8x20xf32>
    %104 = arith.mulf %94, %75 : vector<8x20xf32>
    %105 = arith.addf %103, %104 : vector<8x20xf32>
    %106 = tpu.concatenate %45, %75, %105 in 0 : vector<8x20xf32>, vector<8x20xf32>, vector<8x20xf32> -> vector<24x20xf32>
    %c1 = arith.constant 1 : index
    %c0_22 = arith.constant 0 : index
    %c0_23 = arith.constant 0 : index
    %107 = vector.load %arg1[%c1, %c0_22, %c0_23] : memref<4x20x384xbf16, #tpu.memory_space<vmem>>, vector<1x20x384xbf16>
    %108 = vector.shape_cast %107 : vector<1x20x384xbf16> to vector<20x384xbf16>
    %c3 = arith.constant 3 : index
    %c0_24 = arith.constant 0 : index
    %c0_25 = arith.constant 0 : index
    %109 = vector.load %arg1[%c3, %c0_24, %c0_25] : memref<4x20x384xbf16, #tpu.memory_space<vmem>>, vector<1x20x384xbf16>
    %110 = vector.shape_cast %109 : vector<1x20x384xbf16> to vector<20x384xbf16>
    %111 = vector.extract_strided_slice %0 {offsets = [1, 0], sizes = [1, 384], strides = [1, 1]} : vector<6x384xf32> to vector<1x384xf32>
    %112 = vector.extract_strided_slice %0 {offsets = [3, 0], sizes = [1, 20], strides = [1, 1]} : vector<6x384xf32> to vector<1x20xf32>
    %113 = vector.shape_cast %112 : vector<1x20xf32> to vector<1x20xf32>
    %114 = vector.broadcast %113 : vector<1x20xf32> to vector<8x20xf32>
    %115 = arith.truncf %106 : vector<24x20xf32> to vector<24x20xbf16>
    %cst_26 = arith.constant dense<0.000000e+00> : vector<24x384xf32>
    %116 = tpu.matmul %115, %108, %cst_26 {dimension_numbers = #tpu.dot_dimension_numbers<[1], [0], [0], [1], [0, 0, 1, 1], [], []>} : vector<24x20xbf16>, vector<20x384xbf16>, vector<24x384xf32> -> vector<24x384xf32>
    %117 = vector.broadcast %111 : vector<1x384xf32> to vector<24x384xf32>
    %118 = arith.addf %116, %117 : vector<24x384xf32>
    %119 = vector.extract_strided_slice %118 {offsets = [0, 0], sizes = [8, 384], strides = [1, 1]} : vector<24x384xf32> to vector<8x384xf32>
    %120 = arith.truncf %3 : vector<8x20xf32> to vector<8x20xbf16>
    %cst_27 = arith.constant dense<0.000000e+00> : vector<8x384xf32>
    %121 = tpu.matmul %120, %110, %cst_27 {dimension_numbers = #tpu.dot_dimension_numbers<[1], [0], [0], [1], [0, 0, 1, 1], [], []>} : vector<8x20xbf16>, vector<20x384xbf16>, vector<8x384xf32> -> vector<8x384xf32>
    %122 = vector.extract_strided_slice %119 {offsets = [0, 0], sizes = [8, 20], strides = [1, 1]} : vector<8x384xf32> to vector<8x20xf32>
    %123 = vector.extract_strided_slice %121 {offsets = [0, 0], sizes = [8, 20], strides = [1, 1]} : vector<8x384xf32> to vector<8x20xf32>
    %124 = arith.addf %122, %123 : vector<8x20xf32>
    %125 = arith.negf %124 : vector<8x20xf32>
    %126 = math.exp %125 : vector<8x20xf32>
    %cst_28 = arith.constant 1.000000e+00 : f32
    %127 = vector.broadcast %cst_28 : f32 to vector<8x20xf32>
    %128 = arith.addf %127, %126 : vector<8x20xf32>
    %129 = arith.divf %127, %128 : vector<8x20xf32>
    %130 = vector.extract_strided_slice %119 {offsets = [0, 128], sizes = [8, 20], strides = [1, 1]} : vector<8x384xf32> to vector<8x20xf32>
    %131 = vector.extract_strided_slice %121 {offsets = [0, 128], sizes = [8, 20], strides = [1, 1]} : vector<8x384xf32> to vector<8x20xf32>
    %132 = arith.addf %130, %131 : vector<8x20xf32>
    %133 = arith.negf %132 : vector<8x20xf32>
    %134 = math.exp %133 : vector<8x20xf32>
    %cst_29 = arith.constant 1.000000e+00 : f32
    %135 = vector.broadcast %cst_29 : f32 to vector<8x20xf32>
    %136 = arith.addf %135, %134 : vector<8x20xf32>
    %137 = arith.divf %135, %136 : vector<8x20xf32>
    %138 = vector.extract_strided_slice %119 {offsets = [0, 256], sizes = [8, 20], strides = [1, 1]} : vector<8x384xf32> to vector<8x20xf32>
    %139 = vector.extract_strided_slice %121 {offsets = [0, 256], sizes = [8, 20], strides = [1, 1]} : vector<8x384xf32> to vector<8x20xf32>
    %140 = arith.addf %139, %114 : vector<8x20xf32>
    %141 = arith.mulf %129, %140 : vector<8x20xf32>
    %142 = arith.addf %138, %141 : vector<8x20xf32>
    %143 = math.tanh %142 : vector<8x20xf32>
    %cst_30 = arith.constant 1.000000e+00 : f32
    %144 = vector.broadcast %cst_30 : f32 to vector<8x20xf32>
    %145 = arith.subf %144, %137 : vector<8x20xf32>
    %146 = arith.mulf %145, %143 : vector<8x20xf32>
    %147 = arith.mulf %137, %3 : vector<8x20xf32>
    %148 = arith.addf %146, %147 : vector<8x20xf32>
    %149 = vector.extract_strided_slice %118 {offsets = [8, 0], sizes = [8, 384], strides = [1, 1]} : vector<24x384xf32> to vector<8x384xf32>
    %150 = arith.truncf %148 : vector<8x20xf32> to vector<8x20xbf16>
    %cst_31 = arith.constant dense<0.000000e+00> : vector<8x384xf32>
    %151 = tpu.matmul %150, %110, %cst_31 {dimension_numbers = #tpu.dot_dimension_numbers<[1], [0], [0], [1], [0, 0, 1, 1], [], []>} : vector<8x20xbf16>, vector<20x384xbf16>, vector<8x384xf32> -> vector<8x384xf32>
    %152 = vector.extract_strided_slice %149 {offsets = [0, 0], sizes = [8, 20], strides = [1, 1]} : vector<8x384xf32> to vector<8x20xf32>
    %153 = vector.extract_strided_slice %151 {offsets = [0, 0], sizes = [8, 20], strides = [1, 1]} : vector<8x384xf32> to vector<8x20xf32>
    %154 = arith.addf %152, %153 : vector<8x20xf32>
    %155 = arith.negf %154 : vector<8x20xf32>
    %156 = math.exp %155 : vector<8x20xf32>
    %cst_32 = arith.constant 1.000000e+00 : f32
    %157 = vector.broadcast %cst_32 : f32 to vector<8x20xf32>
    %158 = arith.addf %157, %156 : vector<8x20xf32>
    %159 = arith.divf %157, %158 : vector<8x20xf32>
    %160 = vector.extract_strided_slice %149 {offsets = [0, 128], sizes = [8, 20], strides = [1, 1]} : vector<8x384xf32> to vector<8x20xf32>
    %161 = vector.extract_strided_slice %151 {offsets = [0, 128], sizes = [8, 20], strides = [1, 1]} : vector<8x384xf32> to vector<8x20xf32>
    %162 = arith.addf %160, %161 : vector<8x20xf32>
    %163 = arith.negf %162 : vector<8x20xf32>
    %164 = math.exp %163 : vector<8x20xf32>
    %cst_33 = arith.constant 1.000000e+00 : f32
    %165 = vector.broadcast %cst_33 : f32 to vector<8x20xf32>
    %166 = arith.addf %165, %164 : vector<8x20xf32>
    %167 = arith.divf %165, %166 : vector<8x20xf32>
    %168 = vector.extract_strided_slice %149 {offsets = [0, 256], sizes = [8, 20], strides = [1, 1]} : vector<8x384xf32> to vector<8x20xf32>
    %169 = vector.extract_strided_slice %151 {offsets = [0, 256], sizes = [8, 20], strides = [1, 1]} : vector<8x384xf32> to vector<8x20xf32>
    %170 = arith.addf %169, %114 : vector<8x20xf32>
    %171 = arith.mulf %159, %170 : vector<8x20xf32>
    %172 = arith.addf %168, %171 : vector<8x20xf32>
    %173 = math.tanh %172 : vector<8x20xf32>
    %cst_34 = arith.constant 1.000000e+00 : f32
    %174 = vector.broadcast %cst_34 : f32 to vector<8x20xf32>
    %175 = arith.subf %174, %167 : vector<8x20xf32>
    %176 = arith.mulf %175, %173 : vector<8x20xf32>
    %177 = arith.mulf %167, %148 : vector<8x20xf32>
    %178 = arith.addf %176, %177 : vector<8x20xf32>
    %179 = vector.extract_strided_slice %118 {offsets = [16, 0], sizes = [8, 384], strides = [1, 1]} : vector<24x384xf32> to vector<8x384xf32>
    %180 = arith.truncf %178 : vector<8x20xf32> to vector<8x20xbf16>
    %cst_35 = arith.constant dense<0.000000e+00> : vector<8x384xf32>
    %181 = tpu.matmul %180, %110, %cst_35 {dimension_numbers = #tpu.dot_dimension_numbers<[1], [0], [0], [1], [0, 0, 1, 1], [], []>} : vector<8x20xbf16>, vector<20x384xbf16>, vector<8x384xf32> -> vector<8x384xf32>
    %182 = vector.extract_strided_slice %179 {offsets = [0, 0], sizes = [8, 20], strides = [1, 1]} : vector<8x384xf32> to vector<8x20xf32>
    %183 = vector.extract_strided_slice %181 {offsets = [0, 0], sizes = [8, 20], strides = [1, 1]} : vector<8x384xf32> to vector<8x20xf32>
    %184 = arith.addf %182, %183 : vector<8x20xf32>
    %185 = arith.negf %184 : vector<8x20xf32>
    %186 = math.exp %185 : vector<8x20xf32>
    %cst_36 = arith.constant 1.000000e+00 : f32
    %187 = vector.broadcast %cst_36 : f32 to vector<8x20xf32>
    %188 = arith.addf %187, %186 : vector<8x20xf32>
    %189 = arith.divf %187, %188 : vector<8x20xf32>
    %190 = vector.extract_strided_slice %179 {offsets = [0, 128], sizes = [8, 20], strides = [1, 1]} : vector<8x384xf32> to vector<8x20xf32>
    %191 = vector.extract_strided_slice %181 {offsets = [0, 128], sizes = [8, 20], strides = [1, 1]} : vector<8x384xf32> to vector<8x20xf32>
    %192 = arith.addf %190, %191 : vector<8x20xf32>
    %193 = arith.negf %192 : vector<8x20xf32>
    %194 = math.exp %193 : vector<8x20xf32>
    %cst_37 = arith.constant 1.000000e+00 : f32
    %195 = vector.broadcast %cst_37 : f32 to vector<8x20xf32>
    %196 = arith.addf %195, %194 : vector<8x20xf32>
    %197 = arith.divf %195, %196 : vector<8x20xf32>
    %198 = vector.extract_strided_slice %179 {offsets = [0, 256], sizes = [8, 20], strides = [1, 1]} : vector<8x384xf32> to vector<8x20xf32>
    %199 = vector.extract_strided_slice %181 {offsets = [0, 256], sizes = [8, 20], strides = [1, 1]} : vector<8x384xf32> to vector<8x20xf32>
    %200 = arith.addf %199, %114 : vector<8x20xf32>
    %201 = arith.mulf %189, %200 : vector<8x20xf32>
    %202 = arith.addf %198, %201 : vector<8x20xf32>
    %203 = math.tanh %202 : vector<8x20xf32>
    %cst_38 = arith.constant 1.000000e+00 : f32
    %204 = vector.broadcast %cst_38 : f32 to vector<8x20xf32>
    %205 = arith.subf %204, %197 : vector<8x20xf32>
    %206 = arith.mulf %205, %203 : vector<8x20xf32>
    %207 = arith.mulf %197, %178 : vector<8x20xf32>
    %208 = arith.addf %206, %207 : vector<8x20xf32>
    %209 = tpu.concatenate %148, %178, %208 in 0 : vector<8x20xf32>, vector<8x20xf32>, vector<8x20xf32> -> vector<24x20xf32>
    %c0_39 = arith.constant 0 : index
    %c0_40 = arith.constant 0 : index
    %c0_41 = arith.constant 0 : index
    %210 = vector.load %arg1[%c0_39, %c0_40, %c0_41] : memref<4x20x384xbf16, #tpu.memory_space<vmem>>, vector<1x20x384xbf16>
    %211 = vector.shape_cast %210 : vector<1x20x384xbf16> to vector<20x384xbf16>
    %c2_42 = arith.constant 2 : index
    %c0_43 = arith.constant 0 : index
    %c0_44 = arith.constant 0 : index
    %212 = vector.load %arg1[%c2_42, %c0_43, %c0_44] : memref<4x20x384xbf16, #tpu.memory_space<vmem>>, vector<1x20x384xbf16>
    %213 = vector.shape_cast %212 : vector<1x20x384xbf16> to vector<20x384xbf16>
    %214 = vector.extract_strided_slice %0 {offsets = [0, 0], sizes = [1, 384], strides = [1, 1]} : vector<6x384xf32> to vector<1x384xf32>
    %215 = vector.extract_strided_slice %0 {offsets = [2, 0], sizes = [1, 20], strides = [1, 1]} : vector<6x384xf32> to vector<1x20xf32>
    %216 = vector.shape_cast %215 : vector<1x20xf32> to vector<1x20xf32>
    %217 = vector.broadcast %216 : vector<1x20xf32> to vector<8x20xf32>
    %218 = arith.truncf %209 : vector<24x20xf32> to vector<24x20xbf16>
    %cst_45 = arith.constant dense<0.000000e+00> : vector<24x384xf32>
    %219 = tpu.matmul %218, %211, %cst_45 {dimension_numbers = #tpu.dot_dimension_numbers<[1], [0], [0], [1], [0, 0, 1, 1], [], []>} : vector<24x20xbf16>, vector<20x384xbf16>, vector<24x384xf32> -> vector<24x384xf32>
    %220 = vector.broadcast %214 : vector<1x384xf32> to vector<24x384xf32>
    %221 = arith.addf %219, %220 : vector<24x384xf32>
    %222 = vector.extract_strided_slice %221 {offsets = [0, 0], sizes = [8, 384], strides = [1, 1]} : vector<24x384xf32> to vector<8x384xf32>
    %223 = vector.extract_strided_slice %222 {offsets = [0, 0], sizes = [8, 20], strides = [1, 1]} : vector<8x384xf32> to vector<8x20xf32>
    %224 = arith.negf %223 : vector<8x20xf32>
    %225 = math.exp %224 : vector<8x20xf32>
    %cst_46 = arith.constant 1.000000e+00 : f32
    %226 = vector.broadcast %cst_46 : f32 to vector<8x20xf32>
    %227 = arith.addf %226, %225 : vector<8x20xf32>
    %228 = arith.divf %226, %227 : vector<8x20xf32>
    %229 = vector.extract_strided_slice %222 {offsets = [0, 128], sizes = [8, 20], strides = [1, 1]} : vector<8x384xf32> to vector<8x20xf32>
    %230 = arith.negf %229 : vector<8x20xf32>
    %231 = math.exp %230 : vector<8x20xf32>
    %cst_47 = arith.constant 1.000000e+00 : f32
    %232 = vector.broadcast %cst_47 : f32 to vector<8x20xf32>
    %233 = arith.addf %232, %231 : vector<8x20xf32>
    %234 = arith.divf %232, %233 : vector<8x20xf32>
    %235 = vector.extract_strided_slice %222 {offsets = [0, 256], sizes = [8, 20], strides = [1, 1]} : vector<8x384xf32> to vector<8x20xf32>
    %236 = arith.mulf %228, %217 : vector<8x20xf32>
    %237 = arith.addf %235, %236 : vector<8x20xf32>
    %238 = math.tanh %237 : vector<8x20xf32>
    %cst_48 = arith.constant 1.000000e+00 : f32
    %239 = vector.broadcast %cst_48 : f32 to vector<8x20xf32>
    %240 = arith.subf %239, %234 : vector<8x20xf32>
    %241 = arith.mulf %240, %238 : vector<8x20xf32>
    %242 = vector.extract_strided_slice %221 {offsets = [8, 0], sizes = [8, 384], strides = [1, 1]} : vector<24x384xf32> to vector<8x384xf32>
    %243 = arith.truncf %241 : vector<8x20xf32> to vector<8x20xbf16>
    %cst_49 = arith.constant dense<0.000000e+00> : vector<8x384xf32>
    %244 = tpu.matmul %243, %213, %cst_49 {dimension_numbers = #tpu.dot_dimension_numbers<[1], [0], [0], [1], [0, 0, 1, 1], [], []>} : vector<8x20xbf16>, vector<20x384xbf16>, vector<8x384xf32> -> vector<8x384xf32>
    %245 = vector.extract_strided_slice %242 {offsets = [0, 0], sizes = [8, 20], strides = [1, 1]} : vector<8x384xf32> to vector<8x20xf32>
    %246 = vector.extract_strided_slice %244 {offsets = [0, 0], sizes = [8, 20], strides = [1, 1]} : vector<8x384xf32> to vector<8x20xf32>
    %247 = arith.addf %245, %246 : vector<8x20xf32>
    %248 = arith.negf %247 : vector<8x20xf32>
    %249 = math.exp %248 : vector<8x20xf32>
    %cst_50 = arith.constant 1.000000e+00 : f32
    %250 = vector.broadcast %cst_50 : f32 to vector<8x20xf32>
    %251 = arith.addf %250, %249 : vector<8x20xf32>
    %252 = arith.divf %250, %251 : vector<8x20xf32>
    %253 = vector.extract_strided_slice %242 {offsets = [0, 128], sizes = [8, 20], strides = [1, 1]} : vector<8x384xf32> to vector<8x20xf32>
    %254 = vector.extract_strided_slice %244 {offsets = [0, 128], sizes = [8, 20], strides = [1, 1]} : vector<8x384xf32> to vector<8x20xf32>
    %255 = arith.addf %253, %254 : vector<8x20xf32>
    %256 = arith.negf %255 : vector<8x20xf32>
    %257 = math.exp %256 : vector<8x20xf32>
    %cst_51 = arith.constant 1.000000e+00 : f32
    %258 = vector.broadcast %cst_51 : f32 to vector<8x20xf32>
    %259 = arith.addf %258, %257 : vector<8x20xf32>
    %260 = arith.divf %258, %259 : vector<8x20xf32>
    %261 = vector.extract_strided_slice %242 {offsets = [0, 256], sizes = [8, 20], strides = [1, 1]} : vector<8x384xf32> to vector<8x20xf32>
    %262 = vector.extract_strided_slice %244 {offsets = [0, 256], sizes = [8, 20], strides = [1, 1]} : vector<8x384xf32> to vector<8x20xf32>
    %263 = arith.addf %262, %217 : vector<8x20xf32>
    %264 = arith.mulf %252, %263 : vector<8x20xf32>
    %265 = arith.addf %261, %264 : vector<8x20xf32>
    %266 = math.tanh %265 : vector<8x20xf32>
    %cst_52 = arith.constant 1.000000e+00 : f32
    %267 = vector.broadcast %cst_52 : f32 to vector<8x20xf32>
    %268 = arith.subf %267, %260 : vector<8x20xf32>
    %269 = arith.mulf %268, %266 : vector<8x20xf32>
    %270 = arith.mulf %260, %241 : vector<8x20xf32>
    %271 = arith.addf %269, %270 : vector<8x20xf32>
    %272 = vector.extract_strided_slice %221 {offsets = [16, 0], sizes = [8, 384], strides = [1, 1]} : vector<24x384xf32> to vector<8x384xf32>
    %273 = arith.truncf %271 : vector<8x20xf32> to vector<8x20xbf16>
    %cst_53 = arith.constant dense<0.000000e+00> : vector<8x384xf32>
    %274 = tpu.matmul %273, %213, %cst_53 {dimension_numbers = #tpu.dot_dimension_numbers<[1], [0], [0], [1], [0, 0, 1, 1], [], []>} : vector<8x20xbf16>, vector<20x384xbf16>, vector<8x384xf32> -> vector<8x384xf32>
    %275 = vector.extract_strided_slice %272 {offsets = [0, 0], sizes = [8, 20], strides = [1, 1]} : vector<8x384xf32> to vector<8x20xf32>
    %276 = vector.extract_strided_slice %274 {offsets = [0, 0], sizes = [8, 20], strides = [1, 1]} : vector<8x384xf32> to vector<8x20xf32>
    %277 = arith.addf %275, %276 : vector<8x20xf32>
    %278 = arith.negf %277 : vector<8x20xf32>
    %279 = math.exp %278 : vector<8x20xf32>
    %cst_54 = arith.constant 1.000000e+00 : f32
    %280 = vector.broadcast %cst_54 : f32 to vector<8x20xf32>
    %281 = arith.addf %280, %279 : vector<8x20xf32>
    %282 = arith.divf %280, %281 : vector<8x20xf32>
    %283 = vector.extract_strided_slice %272 {offsets = [0, 128], sizes = [8, 20], strides = [1, 1]} : vector<8x384xf32> to vector<8x20xf32>
    %284 = vector.extract_strided_slice %274 {offsets = [0, 128], sizes = [8, 20], strides = [1, 1]} : vector<8x384xf32> to vector<8x20xf32>
    %285 = arith.addf %283, %284 : vector<8x20xf32>
    %286 = arith.negf %285 : vector<8x20xf32>
    %287 = math.exp %286 : vector<8x20xf32>
    %cst_55 = arith.constant 1.000000e+00 : f32
    %288 = vector.broadcast %cst_55 : f32 to vector<8x20xf32>
    %289 = arith.addf %288, %287 : vector<8x20xf32>
    %290 = arith.divf %288, %289 : vector<8x20xf32>
    %291 = vector.extract_strided_slice %272 {offsets = [0, 256], sizes = [8, 20], strides = [1, 1]} : vector<8x384xf32> to vector<8x20xf32>
    %292 = vector.extract_strided_slice %274 {offsets = [0, 256], sizes = [8, 20], strides = [1, 1]} : vector<8x384xf32> to vector<8x20xf32>
    %293 = arith.addf %292, %217 : vector<8x20xf32>
    %294 = arith.mulf %282, %293 : vector<8x20xf32>
    %295 = arith.addf %291, %294 : vector<8x20xf32>
    %296 = math.tanh %295 : vector<8x20xf32>
    %cst_56 = arith.constant 1.000000e+00 : f32
    %297 = vector.broadcast %cst_56 : f32 to vector<8x20xf32>
    %298 = arith.subf %297, %290 : vector<8x20xf32>
    %299 = arith.mulf %298, %296 : vector<8x20xf32>
    %300 = arith.mulf %290, %271 : vector<8x20xf32>
    %301 = arith.addf %299, %300 : vector<8x20xf32>
    %302 = tpu.concatenate %241, %271, %301 in 0 : vector<8x20xf32>, vector<8x20xf32>, vector<8x20xf32> -> vector<24x20xf32>
    %c1_57 = arith.constant 1 : index
    %c0_58 = arith.constant 0 : index
    %c0_59 = arith.constant 0 : index
    %303 = vector.load %arg1[%c1_57, %c0_58, %c0_59] : memref<4x20x384xbf16, #tpu.memory_space<vmem>>, vector<1x20x384xbf16>
    %304 = vector.shape_cast %303 : vector<1x20x384xbf16> to vector<20x384xbf16>
    %c3_60 = arith.constant 3 : index
    %c0_61 = arith.constant 0 : index
    %c0_62 = arith.constant 0 : index
    %305 = vector.load %arg1[%c3_60, %c0_61, %c0_62] : memref<4x20x384xbf16, #tpu.memory_space<vmem>>, vector<1x20x384xbf16>
    %306 = vector.shape_cast %305 : vector<1x20x384xbf16> to vector<20x384xbf16>
    %307 = vector.extract_strided_slice %0 {offsets = [1, 0], sizes = [1, 384], strides = [1, 1]} : vector<6x384xf32> to vector<1x384xf32>
    %308 = vector.extract_strided_slice %0 {offsets = [3, 0], sizes = [1, 20], strides = [1, 1]} : vector<6x384xf32> to vector<1x20xf32>
    %309 = vector.shape_cast %308 : vector<1x20xf32> to vector<1x20xf32>
    %310 = vector.broadcast %309 : vector<1x20xf32> to vector<8x20xf32>
    %311 = arith.truncf %302 : vector<24x20xf32> to vector<24x20xbf16>
    %cst_63 = arith.constant dense<0.000000e+00> : vector<24x384xf32>
    %312 = tpu.matmul %311, %304, %cst_63 {dimension_numbers = #tpu.dot_dimension_numbers<[1], [0], [0], [1], [0, 0, 1, 1], [], []>} : vector<24x20xbf16>, vector<20x384xbf16>, vector<24x384xf32> -> vector<24x384xf32>
    %313 = vector.broadcast %307 : vector<1x384xf32> to vector<24x384xf32>
    %314 = arith.addf %312, %313 : vector<24x384xf32>
    %315 = vector.extract_strided_slice %314 {offsets = [0, 0], sizes = [8, 384], strides = [1, 1]} : vector<24x384xf32> to vector<8x384xf32>
    %316 = vector.extract_strided_slice %315 {offsets = [0, 0], sizes = [8, 20], strides = [1, 1]} : vector<8x384xf32> to vector<8x20xf32>
    %317 = arith.negf %316 : vector<8x20xf32>
    %318 = math.exp %317 : vector<8x20xf32>
    %cst_64 = arith.constant 1.000000e+00 : f32
    %319 = vector.broadcast %cst_64 : f32 to vector<8x20xf32>
    %320 = arith.addf %319, %318 : vector<8x20xf32>
    %321 = arith.divf %319, %320 : vector<8x20xf32>
    %322 = vector.extract_strided_slice %315 {offsets = [0, 128], sizes = [8, 20], strides = [1, 1]} : vector<8x384xf32> to vector<8x20xf32>
    %323 = arith.negf %322 : vector<8x20xf32>
    %324 = math.exp %323 : vector<8x20xf32>
    %cst_65 = arith.constant 1.000000e+00 : f32
    %325 = vector.broadcast %cst_65 : f32 to vector<8x20xf32>
    %326 = arith.addf %325, %324 : vector<8x20xf32>
    %327 = arith.divf %325, %326 : vector<8x20xf32>
    %328 = vector.extract_strided_slice %315 {offsets = [0, 256], sizes = [8, 20], strides = [1, 1]} : vector<8x384xf32> to vector<8x20xf32>
    %329 = arith.mulf %321, %310 : vector<8x20xf32>
    %330 = arith.addf %328, %329 : vector<8x20xf32>
    %331 = math.tanh %330 : vector<8x20xf32>
    %cst_66 = arith.constant 1.000000e+00 : f32
    %332 = vector.broadcast %cst_66 : f32 to vector<8x20xf32>
    %333 = arith.subf %332, %327 : vector<8x20xf32>
    %334 = arith.mulf %333, %331 : vector<8x20xf32>
    %335 = vector.extract_strided_slice %314 {offsets = [8, 0], sizes = [8, 384], strides = [1, 1]} : vector<24x384xf32> to vector<8x384xf32>
    %336 = arith.truncf %334 : vector<8x20xf32> to vector<8x20xbf16>
    %cst_67 = arith.constant dense<0.000000e+00> : vector<8x384xf32>
    %337 = tpu.matmul %336, %306, %cst_67 {dimension_numbers = #tpu.dot_dimension_numbers<[1], [0], [0], [1], [0, 0, 1, 1], [], []>} : vector<8x20xbf16>, vector<20x384xbf16>, vector<8x384xf32> -> vector<8x384xf32>
    %338 = vector.extract_strided_slice %335 {offsets = [0, 0], sizes = [8, 20], strides = [1, 1]} : vector<8x384xf32> to vector<8x20xf32>
    %339 = vector.extract_strided_slice %337 {offsets = [0, 0], sizes = [8, 20], strides = [1, 1]} : vector<8x384xf32> to vector<8x20xf32>
    %340 = arith.addf %338, %339 : vector<8x20xf32>
    %341 = arith.negf %340 : vector<8x20xf32>
    %342 = math.exp %341 : vector<8x20xf32>
    %cst_68 = arith.constant 1.000000e+00 : f32
    %343 = vector.broadcast %cst_68 : f32 to vector<8x20xf32>
    %344 = arith.addf %343, %342 : vector<8x20xf32>
    %345 = arith.divf %343, %344 : vector<8x20xf32>
    %346 = vector.extract_strided_slice %335 {offsets = [0, 128], sizes = [8, 20], strides = [1, 1]} : vector<8x384xf32> to vector<8x20xf32>
    %347 = vector.extract_strided_slice %337 {offsets = [0, 128], sizes = [8, 20], strides = [1, 1]} : vector<8x384xf32> to vector<8x20xf32>
    %348 = arith.addf %346, %347 : vector<8x20xf32>
    %349 = arith.negf %348 : vector<8x20xf32>
    %350 = math.exp %349 : vector<8x20xf32>
    %cst_69 = arith.constant 1.000000e+00 : f32
    %351 = vector.broadcast %cst_69 : f32 to vector<8x20xf32>
    %352 = arith.addf %351, %350 : vector<8x20xf32>
    %353 = arith.divf %351, %352 : vector<8x20xf32>
    %354 = vector.extract_strided_slice %335 {offsets = [0, 256], sizes = [8, 20], strides = [1, 1]} : vector<8x384xf32> to vector<8x20xf32>
    %355 = vector.extract_strided_slice %337 {offsets = [0, 256], sizes = [8, 20], strides = [1, 1]} : vector<8x384xf32> to vector<8x20xf32>
    %356 = arith.addf %355, %310 : vector<8x20xf32>
    %357 = arith.mulf %345, %356 : vector<8x20xf32>
    %358 = arith.addf %354, %357 : vector<8x20xf32>
    %359 = math.tanh %358 : vector<8x20xf32>
    %cst_70 = arith.constant 1.000000e+00 : f32
    %360 = vector.broadcast %cst_70 : f32 to vector<8x20xf32>
    %361 = arith.subf %360, %353 : vector<8x20xf32>
    %362 = arith.mulf %361, %359 : vector<8x20xf32>
    %363 = arith.mulf %353, %334 : vector<8x20xf32>
    %364 = arith.addf %362, %363 : vector<8x20xf32>
    %365 = vector.extract_strided_slice %314 {offsets = [16, 0], sizes = [8, 384], strides = [1, 1]} : vector<24x384xf32> to vector<8x384xf32>
    %366 = arith.truncf %364 : vector<8x20xf32> to vector<8x20xbf16>
    %cst_71 = arith.constant dense<0.000000e+00> : vector<8x384xf32>
    %367 = tpu.matmul %366, %306, %cst_71 {dimension_numbers = #tpu.dot_dimension_numbers<[1], [0], [0], [1], [0, 0, 1, 1], [], []>} : vector<8x20xbf16>, vector<20x384xbf16>, vector<8x384xf32> -> vector<8x384xf32>
    %368 = vector.extract_strided_slice %365 {offsets = [0, 0], sizes = [8, 20], strides = [1, 1]} : vector<8x384xf32> to vector<8x20xf32>
    %369 = vector.extract_strided_slice %367 {offsets = [0, 0], sizes = [8, 20], strides = [1, 1]} : vector<8x384xf32> to vector<8x20xf32>
    %370 = arith.addf %368, %369 : vector<8x20xf32>
    %371 = arith.negf %370 : vector<8x20xf32>
    %372 = math.exp %371 : vector<8x20xf32>
    %cst_72 = arith.constant 1.000000e+00 : f32
    %373 = vector.broadcast %cst_72 : f32 to vector<8x20xf32>
    %374 = arith.addf %373, %372 : vector<8x20xf32>
    %375 = arith.divf %373, %374 : vector<8x20xf32>
    %376 = vector.extract_strided_slice %365 {offsets = [0, 128], sizes = [8, 20], strides = [1, 1]} : vector<8x384xf32> to vector<8x20xf32>
    %377 = vector.extract_strided_slice %367 {offsets = [0, 128], sizes = [8, 20], strides = [1, 1]} : vector<8x384xf32> to vector<8x20xf32>
    %378 = arith.addf %376, %377 : vector<8x20xf32>
    %379 = arith.negf %378 : vector<8x20xf32>
    %380 = math.exp %379 : vector<8x20xf32>
    %cst_73 = arith.constant 1.000000e+00 : f32
    %381 = vector.broadcast %cst_73 : f32 to vector<8x20xf32>
    %382 = arith.addf %381, %380 : vector<8x20xf32>
    %383 = arith.divf %381, %382 : vector<8x20xf32>
    %384 = vector.extract_strided_slice %365 {offsets = [0, 256], sizes = [8, 20], strides = [1, 1]} : vector<8x384xf32> to vector<8x20xf32>
    %385 = vector.extract_strided_slice %367 {offsets = [0, 256], sizes = [8, 20], strides = [1, 1]} : vector<8x384xf32> to vector<8x20xf32>
    %386 = arith.addf %385, %310 : vector<8x20xf32>
    %387 = arith.mulf %375, %386 : vector<8x20xf32>
    %388 = arith.addf %384, %387 : vector<8x20xf32>
    %389 = math.tanh %388 : vector<8x20xf32>
    %cst_74 = arith.constant 1.000000e+00 : f32
    %390 = vector.broadcast %cst_74 : f32 to vector<8x20xf32>
    %391 = arith.subf %390, %383 : vector<8x20xf32>
    %392 = arith.mulf %391, %389 : vector<8x20xf32>
    %393 = arith.mulf %383, %364 : vector<8x20xf32>
    %394 = arith.addf %392, %393 : vector<8x20xf32>
    %395 = vector.extract_strided_slice %0 {offsets = [4, 0], sizes = [1, 20], strides = [1, 1]} : vector<6x384xf32> to vector<1x20xf32>
    %396 = vector.extract_strided_slice %0 {offsets = [5, 0], sizes = [1, 1], strides = [1, 1]} : vector<6x384xf32> to vector<1x1xf32>
    %397 = vector.extract_strided_slice %394 {offsets = [0, 0], sizes = [5, 20], strides = [1, 1]} : vector<8x20xf32> to vector<5x20xf32>
    %398 = vector.broadcast %395 : vector<1x20xf32> to vector<5x20xf32>
    %399 = arith.mulf %397, %398 : vector<5x20xf32>
    %cst_75 = arith.constant dense<0.000000e+00> : vector<5xf32>
    %400 = vector.multi_reduction <add>, %399, %cst_75 [1] : vector<5x20xf32> to vector<5xf32>
    %401 = vector.shape_cast %400 : vector<5xf32> to vector<5x1xf32>
    %402 = vector.broadcast %396 : vector<1x1xf32> to vector<5x1xf32>
    %403 = arith.addf %401, %402 : vector<5x1xf32>
    %c0_76 = arith.constant 0 : index
    %c0_77 = arith.constant 0 : index
    %404 = vector.load %arg3[%c0_76, %c0_77] : memref<5x1xf32, #tpu.memory_space<vmem>>, vector<5x1xf32>
    tpu.vector_store %arg3[%c0_76, %c0_77], %403 {strides = array<i32>} : memref<5x1xf32, #tpu.memory_space<vmem>>, vector<5x1xf32>,
    return
  }
}

</mosaic_0001>

<llo_original>
// kernel: time_series_prediction_forward.3
$region0: #{time_series_prediction_forward.3}
  #allocation0 [shape = 'u32[]', space=smem, size = 0x4, offset = 0x4, fixed_abs, tag = 'smem constant byte address 0x4 - core index']
  #allocation1 [shape = 'u32[144,128]{1,0:T(1,128)}', space=vmem, size = 0x12000, scoped, tag = 'internal scratch']
  %s0 = inlined_call_operand.vmem [shape: f32[40,20], index: 0, kind: input, shape index: {}]
  %s1 = inlined_call_operand.vmem [shape: bf16[4,20,384], index: 1, kind: input, shape index: {}]
  %s2 = inlined_call_operand.vmem [shape: f32[6,384], index: 2, kind: input, shape index: {}]
  %s3 = inlined_call_operand.vmem [shape: f32[5,1], index: 3, kind: output, shape index: {}]
  %s4 = sld [smem:[#allocation0]]
  $region22: #{time_series_prediction_forward.3} parent=0
    _
  %s6 = ssub.s32 1, %s4
  %s7 = scalar_select 0, %s6, %s4
  // Predicated region
  $region2: #{time_series_prediction_forward.3} parent=0 // pred_check
    _
  $region3: #{time_series_prediction_forward.3} parent=0 // pred_check_branch
    %9 = sbr.rel (0) target = $region5
  $region4: #{time_series_prediction_forward.3} parent=0 // pred_region
    _
  $region5: #{time_series_prediction_forward.3} parent=0 // pred_fallthru
    _
  // Predicated region
  $region6: #{time_series_prediction_forward.3} parent=0 // pred_check
    _
  $region7: #{time_series_prediction_forward.3} parent=0 // pred_check_branch
    %11 = sbr.rel (0) target = $region9
  $region8: #{time_series_prediction_forward.3} parent=0 // pred_region
    _
  $region9: #{time_series_prediction_forward.3} parent=0 // pred_fallthru
    _
  // Predicated region
  $region10: #{time_series_prediction_forward.3} parent=0 // pred_check
    _
  $region11: #{time_series_prediction_forward.3} parent=0 // pred_check_branch
    %13 = sbr.rel (0) target = $region13
  $region12: #{time_series_prediction_forward.3} parent=0 // pred_region
    _
  $region13: #{time_series_prediction_forward.3} parent=0 // pred_fallthru
    _
  %v15 = vld [vmem:[%s2] sm:$0x3f]
  %v16 = vld [vmem:[%s2 + $0x8] sm:$0x3f]
  %v17 = vld [vmem:[%s2 + $0x10] sm:$0x3f]
  %v18 = vld [vmem:[%s0] sm:$0xff]
  %v19 = vld [vmem:[%s0 + $0x8] sm:$0xff]
  %v20 = vld [vmem:[%s0 + $0x10] sm:$0xff]
  %v21 = vld [vmem:[%s0 + $0x18] sm:$0xff]
  %v22 = vld [vmem:[%s0 + $0x20] sm:$0xff]
  %v23 = vld [vmem:[%s1] sm:$0xff]
  %v24 = vld [vmem:[%s1 + $0x8] sm:$0xf]
  %v25 = vld [vmem:[%s1 + $0xc] sm:$0xff]
  %v26 = vld [vmem:[%s1 + $0x14] sm:$0xf]
  %v27 = vld [vmem:[%s1 + $0x18] sm:$0x33]
  %v28 = vld [vmem:[%s1 + $0x20] sm:$0x3]
  %s29 = scalar_lea.vmem %s1, 72
  %v30 = vld [vmem:[%s29] sm:$0xff]
  %v31 = vld [vmem:[%s29 + $0x8] sm:$0xf]
  %v32 = vld [vmem:[%s29 + $0xc] sm:$0xff]
  %v33 = vld [vmem:[%s29 + $0x14] sm:$0xf]
  %v34 = vld [vmem:[%s29 + $0x18] sm:$0x33]
  %v35 = vld [vmem:[%s29 + $0x20] sm:$0x3]
  %v36 = vlaneseq
  %v37 = vshrl.u32 %v36, 7
  %v38 = vsub.s32 2, %v37
  %v39 = vrot.slane %v15, %v38
  %v40 = vpack.c.bf16 %v19, %v18
  %v41 = vpack.c.bf16 %v20, %v20
  %v42 = vlaneseq
  %v43 = vshrl.u32 %v42, 7
  %v44 = vsub.s32 0, %v43
  %v45 = vrot.slane %v15, %v44
  %v46 = vlaneseq
  %v47 = vshrl.u32 %v46, 7
  %v48 = vsub.s32 0, %v47
  %v49 = vrot.slane %v16, %v48
  %v50 = vlaneseq
  %v51 = vshrl.u32 %v50, 7
  %v52 = vsub.s32 0, %v51
  %v53 = vrot.slane %v17, %v52
  %v60 = vunpack.c.l.b16 %v23
  %v61 = vunpack.c.h.b16 %v23
  %v62 = vunpack.c.l.b16 %v24
  %v63 = vunpack.c.l.b16 %v25
  %v64 = vunpack.c.h.b16 %v25
  %v65 = vunpack.c.l.b16 %v26
  %v66 = vunpack.c.l.b16 %v27
  %v67 = vunpack.c.h.b16 %v27
  %v68 = vunpack.c.l.b16 %v28
  %v69 = vpack.c.b16 %v63, %v60
  %v70 = vpack.c.b16 %v64, %v61
  %v71 = vpack.c.b16 %v65, %v62
  %v72 = vpack.c.b16 %v66, %v66
  %v73 = vpack.c.b16 %v67, %v67
  %v74 = vpack.c.b16 %v68, %v68
  %vm78 = vcmask 162816
  %v80 = vsel %vm78, %v40, 0
  %v83 = vsel %vm78, %v41, 0
  %vm85 = vcmask 1041408
  %v87 = vsel %vm85, %v72, 0
  %v90 = vsel %vm85, %v73, 0
  %v93 = vsel %vm85, %v74, 0
  %95 = vmatprep.subr.bf16.mxu0 %v70
  %96 = vmatpush1.bf16.msra.mxu0 %v69
  %97 = vmatprep.subr.bf16.mxu0 %v90
  %98 = vmatpush1.bf16.msra.mxu0 %v87
  %99 = vmatprep.subr.bf16.mxu0 0
  %100 = vmatpush1.bf16.msra.mxu0 0
  %101 = vmatprep.subr.bf16.mxu0 0
  %102 = vmatpush1.bf16.msra.mxu0 0
  %103 = vmatprep.subr.bf16.mxu0 0
  %104 = vmatpush1.bf16.msra.mxu0 0
  %105 = vmatprep.subr.bf16.mxu0 0
  %106 = vmatpush1.bf16.msra.mxu0 0
  %107 = vmatprep.subr.bf16.mxu0 0
  %108 = vmatpush1.bf16.msra.mxu0 0
  %109 = vmatprep.subr.bf16.mxu0 0
  %110 = vmatpush1.bf16.msra.mxu0 0
  %111 = vmatprep.subr.bf16.mxu0 0
  %112 = vmatpush1.bf16.msra.mxu0 0
  %113 = vmatprep.subr.bf16.mxu0 0
  %114 = vmatpush1.bf16.msra.mxu0 0
  %115 = vmatprep.subr.bf16.mxu0 0
  %116 = vmatpush1.bf16.msra.mxu0 0
  %117 = vmatprep.subr.bf16.mxu0 0
  %118 = vmatpush1.bf16.msra.mxu0 0
  %119 = vmatprep.subr.bf16.mxu0 0
  %120 = vmatpush1.bf16.msra.mxu0 0
  %121 = vmatprep.subr.bf16.mxu0 0
  %122 = vmatpush1.bf16.msra.mxu0 0
  %123 = vmatprep.subr.bf16.mxu0 0
  %124 = vmatpush1.bf16.msra.mxu0 0
  %125 = vmatprep.subr.bf16.mxu0 0
  %126 = vmatpush1.bf16.msra.mxu0 0
  %127 = vmatprep.mubr.bf16.mxu0 0
  %128 = vmatmul.mubr.bf16.gmra.mrb[0].mxu0 %v80
  %v129 = vpop.f32.mrb[0].mxu0
  %v130 = vadd.f32 %v45, %v129
  %v131 = vpop.f32.mrb[0].mxu0
  %v132 = vadd.f32 %v49, %v131
  %v133 = vpop.f32.mrb[0].mxu0
  %v134 = vadd.f32 %v45, %v133
  %v135 = vpop.f32.mrb[0].mxu0
  %v136 = vadd.f32 %v49, %v135
  %137 = vmatprep.mubr.bf16.mxu0 0
  %138 = vmatmul.mubr.bf16.gmra.mrb[0].mxu0 %v83
  %v139 = vpop.f32.mrb[0].mxu0
  %v140 = vadd.f32 %v45, %v139
  %v141 = vpop.f32.mrb[0].mxu0
  %v142 = vadd.f32 %v49, %v141
  %v143 = vpop.f32.mrb[0].mxu0
  %v144 = vpop.f32.mrb[0].mxu0
  %145 = vdwg.mxu0
  %146 = vmatprep.subr.bf16.mxu0 0
  %147 = vmatpush1.bf16.msra.mxu0 %v71
  %148 = vmatprep.subr.bf16.mxu0 0
  %149 = vmatpush1.bf16.msra.mxu0 %v93
  %150 = vmatprep.subr.bf16.mxu0 0
  %151 = vmatpush1.bf16.msra.mxu0 0
  %152 = vmatprep.subr.bf16.mxu0 0
  %153 = vmatpush1.bf16.msra.mxu0 0
  %154 = vmatprep.subr.bf16.mxu0 0
  %155 = vmatpush1.bf16.msra.mxu0 0
  %156 = vmatprep.subr.bf16.mxu0 0
  %157 = vmatpush1.bf16.msra.mxu0 0
  %158 = vmatprep.subr.bf16.mxu0 0
  %159 = vmatpush1.bf16.msra.mxu0 0
  %160 = vmatprep.subr.bf16.mxu0 0
  %161 = vmatpush1.bf16.msra.mxu0 0
  %162 = vmatprep.subr.bf16.mxu0 0
  %163 = vmatpush1.bf16.msra.mxu0 0
  %164 = vmatprep.subr.bf16.mxu0 0
  %165 = vmatpush1.bf16.msra.mxu0 0
  %166 = vmatprep.subr.bf16.mxu0 0
  %167 = vmatpush1.bf16.msra.mxu0 0
  %168 = vmatprep.subr.bf16.mxu0 0
  %169 = vmatpush1.bf16.msra.mxu0 0
  %170 = vmatprep.subr.bf16.mxu0 0
  %171 = vmatpush1.bf16.msra.mxu0 0
  %172 = vmatprep.subr.bf16.mxu0 0
  %173 = vmatpush1.bf16.msra.mxu0 0
  %174 = vmatprep.subr.bf16.mxu0 0
  %175 = vmatpush1.bf16.msra.mxu0 0
  %176 = vmatprep.subr.bf16.mxu0 0
  %177 = vmatpush1.bf16.msra.mxu0 0
  %178 = vmatprep.mubr.bf16.mxu0 0
  %179 = vmatmul.mubr.bf16.gmra.mrb[0].mxu0 %v80
  %v180 = vpop.f32.mrb[0].mxu0
  %v181 = vadd.f32 %v53, %v180
  %v182 = vpop.f32.mrb[0].mxu0
  %v183 = vpop.f32.mrb[0].mxu0
  %v184 = vadd.f32 %v53, %v183
  %v185 = vpop.f32.mrb[0].mxu0
  %186 = vmatprep.mubr.bf16.mxu0 0
  %187 = vmatmul.mubr.bf16.gmra.mrb[0].mxu0 %v83
  %v188 = vpop.f32.mrb[0].mxu0
  %v189 = vadd.f32 %v53, %v188
  %v190 = vpop.f32.mrb[0].mxu0
  %v191 = vpop.f32.mrb[0].mxu0
  %v192 = vpop.f32.mrb[0].mxu0
  %193 = vdwg.mxu0
  %v194 = vpack.c.bf16 %v21, %v21
  %v201 = vunpack.c.l.b16 %v30
  %v202 = vunpack.c.h.b16 %v30
  %v203 = vunpack.c.l.b16 %v31
  %v204 = vunpack.c.l.b16 %v32
  %v205 = vunpack.c.h.b16 %v32
  %v206 = vunpack.c.l.b16 %v33
  %v207 = vunpack.c.l.b16 %v34
  %v208 = vunpack.c.h.b16 %v34
  %v209 = vunpack.c.l.b16 %v35
  %v210 = vpack.c.b16 %v204, %v201
  %v211 = vpack.c.b16 %v205, %v202
  %v212 = vpack.c.b16 %v206, %v203
  %v213 = vpack.c.b16 %v207, %v207
  %v214 = vpack.c.b16 %v208, %v208
  %v215 = vpack.c.b16 %v209, %v209
  %v220 = vsel %vm78, %v194, 0
  %v223 = vsel %vm85, %v213, 0
  %v226 = vsel %vm85, %v214, 0
  %v229 = vsel %vm85, %v215, 0
  %231 = vmatprep.subr.bf16.mxu0 %v211
  %232 = vmatpush1.bf16.msra.mxu0 %v210
  %233 = vmatprep.subr.bf16.mxu0 %v226
  %234 = vmatpush1.bf16.msra.mxu0 %v223
  %235 = vmatprep.subr.bf16.mxu0 0
  %236 = vmatpush1.bf16.msra.mxu0 0
  %237 = vmatprep.subr.bf16.mxu0 0
  %238 = vmatpush1.bf16.msra.mxu0 0
  %239 = vmatprep.subr.bf16.mxu0 0
  %240 = vmatpush1.bf16.msra.mxu0 0
  %241 = vmatprep.subr.bf16.mxu0 0
  %242 = vmatpush1.bf16.msra.mxu0 0
  %243 = vmatprep.subr.bf16.mxu0 0
  %244 = vmatpush1.bf16.msra.mxu0 0
  %245 = vmatprep.subr.bf16.mxu0 0
  %246 = vmatpush1.bf16.msra.mxu0 0
  %247 = vmatprep.subr.bf16.mxu0 0
  %248 = vmatpush1.bf16.msra.mxu0 0
  %249 = vmatprep.subr.bf16.mxu0 0
  %250 = vmatpush1.bf16.msra.mxu0 0
  %251 = vmatprep.subr.bf16.mxu0 0
  %252 = vmatpush1.bf16.msra.mxu0 0
  %253 = vmatprep.subr.bf16.mxu0 0
  %254 = vmatpush1.bf16.msra.mxu0 0
  %255 = vmatprep.subr.bf16.mxu0 0
  %256 = vmatpush1.bf16.msra.mxu0 0
  %257 = vmatprep.subr.bf16.mxu0 0
  %258 = vmatpush1.bf16.msra.mxu0 0
  %259 = vmatprep.subr.bf16.mxu0 0
  %260 = vmatpush1.bf16.msra.mxu0 0
  %261 = vmatprep.subr.bf16.mxu0 0
  %262 = vmatpush1.bf16.msra.mxu0 0
  %263 = vmatprep.mubr.bf16.mxu0 0
  %264 = vmatmul.mubr.bf16.gmra.mrb[0].mxu0 %v220
  %v265 = vpop.f32.mrb[0].mxu0
  %v266 = vadd.f32 0.0, %v265
  %v267 = vpop.f32.mrb[0].mxu0
  %v268 = vadd.f32 0.0, %v267
  %v269 = vpop.f32.mrb[0].mxu0
  %v270 = vpop.f32.mrb[0].mxu0
  %271 = vdwg.mxu0
  %272 = vmatprep.subr.bf16.mxu0 0
  %273 = vmatpush1.bf16.msra.mxu0 %v212
  %274 = vmatprep.subr.bf16.mxu0 0
  %275 = vmatpush1.bf16.msra.mxu0 %v229
  %276 = vmatprep.subr.bf16.mxu0 0
  %277 = vmatpush1.bf16.msra.mxu0 0
  %278 = vmatprep.subr.bf16.mxu0 0
  %279 = vmatpush1.bf16.msra.mxu0 0
  %280 = vmatprep.subr.bf16.mxu0 0
  %281 = vmatpush1.bf16.msra.mxu0 0
  %282 = vmatprep.subr.bf16.mxu0 0
  %283 = vmatpush1.bf16.msra.mxu0 0
  %284 = vmatprep.subr.bf16.mxu0 0
  %285 = vmatpush1.bf16.msra.mxu0 0
  %286 = vmatprep.subr.bf16.mxu0 0
  %287 = vmatpush1.bf16.msra.mxu0 0
  %288 = vmatprep.subr.bf16.mxu0 0
  %289 = vmatpush1.bf16.msra.mxu0 0
  %290 = vmatprep.subr.bf16.mxu0 0
  %291 = vmatpush1.bf16.msra.mxu0 0
  %292 = vmatprep.subr.bf16.mxu0 0
  %293 = vmatpush1.bf16.msra.mxu0 0
  %294 = vmatprep.subr.bf16.mxu0 0
  %295 = vmatpush1.bf16.msra.mxu0 0
  %296 = vmatprep.subr.bf16.mxu0 0
  %297 = vmatpush1.bf16.msra.mxu0 0
  %298 = vmatprep.subr.bf16.mxu0 0
  %299 = vmatpush1.bf16.msra.mxu0 0
  %300 = vmatprep.subr.bf16.mxu0 0
  %301 = vmatpush1.bf16.msra.mxu0 0
  %302 = vmatprep.subr.bf16.mxu0 0
  %303 = vmatpush1.bf16.msra.mxu0 0
  %304 = vmatprep.mubr.bf16.mxu0 0
  %305 = vmatmul.mubr.bf16.gmra.mrb[0].mxu0 %v220
  %v306 = vpop.f32.mrb[0].mxu0
  %v307 = vadd.f32 0.0, %v306
  %v308 = vpop.f32.mrb[0].mxu0
  %v309 = vpop.f32.mrb[0].mxu0
  %v310 = vpop.f32.mrb[0].mxu0
  %311 = vdwg.mxu0
  %v312 = vadd.f32 %v130, %v266
  %v313 = vxor.u32 %v312, 2147483648
  %v314 = vmul.f32 %v313, 1.442695
  %v315 = vpow.pop %v314
  %v316 = vadd.f32 %v315, 1.0
  %v317 = vrcp.pop %v316
  %v318 = vmul.f32 1.0, %v317
  %v319 = vadd.f32 %v132, %v268
  %v320 = vxor.u32 %v319, 2147483648
  %v321 = vmul.f32 %v320, 1.442695
  %v322 = vpow.pop %v321
  %v323 = vadd.f32 %v322, 1.0
  %v324 = vrcp.pop %v323
  %v325 = vmul.f32 1.0, %v324
  %v326 = vadd.f32 %v307, %v39
  %v327 = vmul.f32 %v318, %v326
  %v328 = vadd.f32 %v181, %v327
  %v329 = vtanh.pop %v328
  %v330 = vsub.f32 1.0, %v325
  %v331 = vmul.f32 %v330, %v329
  %v332 = vmul.f32 %v325, %v21
  %v333 = vadd.f32 %v331, %v332
  %v334 = vpack.c.bf16 %v333, %v333
  %v336 = vsel %vm78, %v334, 0
  %338 = vmatprep.subr.bf16.mxu0 %v211
  %339 = vmatpush1.bf16.msra.mxu0 %v210
  %340 = vmatprep.subr.bf16.mxu0 %v226
  %341 = vmatpush1.bf16.msra.mxu0 %v223
  %342 = vmatprep.subr.bf16.mxu0 0
  %343 = vmatpush1.bf16.msra.mxu0 0
  %344 = vmatprep.subr.bf16.mxu0 0
  %345 = vmatpush1.bf16.msra.mxu0 0
  %346 = vmatprep.subr.bf16.mxu0 0
  %347 = vmatpush1.bf16.msra.mxu0 0
  %348 = vmatprep.subr.bf16.mxu0 0
  %349 = vmatpush1.bf16.msra.mxu0 0
  %350 = vmatprep.subr.bf16.mxu0 0
  %351 = vmatpush1.bf16.msra.mxu0 0
  %352 = vmatprep.subr.bf16.mxu0 0
  %353 = vmatpush1.bf16.msra.mxu0 0
  %354 = vmatprep.subr.bf16.mxu0 0
  %355 = vmatpush1.bf16.msra.mxu0 0
  %356 = vmatprep.subr.bf16.mxu0 0
  %357 = vmatpush1.bf16.msra.mxu0 0
  %358 = vmatprep.subr.bf16.mxu0 0
  %359 = vmatpush1.bf16.msra.mxu0 0
  %360 = vmatprep.subr.bf16.mxu0 0
  %361 = vmatpush1.bf16.msra.mxu0 0
  %362 = vmatprep.subr.bf16.mxu0 0
  %363 = vmatpush1.bf16.msra.mxu0 0
  %364 = vmatprep.subr.bf16.mxu0 0
  %365 = vmatpush1.bf16.msra.mxu0 0
  %366 = vmatprep.subr.bf16.mxu0 0
  %367 = vmatpush1.bf16.msra.mxu0 0
  %368 = vmatprep.subr.bf16.mxu0 0
  %369 = vmatpush1.bf16.msra.mxu0 0
  %370 = vmatprep.mubr.bf16.mxu0 0
  %371 = vmatmul.mubr.bf16.gmra.mrb[0].mxu0 %v336
  %v372 = vpop.f32.mrb[0].mxu0
  %v373 = vadd.f32 0.0, %v372
  %v374 = vpop.f32.mrb[0].mxu0
  %v375 = vadd.f32 0.0, %v374
  %v376 = vpop.f32.mrb[0].mxu0
  %v377 = vpop.f32.mrb[0].mxu0
  %378 = vdwg.mxu0
  %379 = vmatprep.subr.bf16.mxu0 0
  %380 = vmatpush1.bf16.msra.mxu0 %v212
  %381 = vmatprep.subr.bf16.mxu0 0
  %382 = vmatpush1.bf16.msra.mxu0 %v229
  %383 = vmatprep.subr.bf16.mxu0 0
  %384 = vmatpush1.bf16.msra.mxu0 0
  %385 = vmatprep.subr.bf16.mxu0 0
  %386 = vmatpush1.bf16.msra.mxu0 0
  %387 = vmatprep.subr.bf16.mxu0 0
  %388 = vmatpush1.bf16.msra.mxu0 0
  %389 = vmatprep.subr.bf16.mxu0 0
  %390 = vmatpush1.bf16.msra.mxu0 0
  %391 = vmatprep.subr.bf16.mxu0 0
  %392 = vmatpush1.bf16.msra.mxu0 0
  %393 = vmatprep.subr.bf16.mxu0 0
  %394 = vmatpush1.bf16.msra.mxu0 0
  %395 = vmatprep.subr.bf16.mxu0 0
  %396 = vmatpush1.bf16.msra.mxu0 0
  %397 = vmatprep.subr.bf16.mxu0 0
  %398 = vmatpush1.bf16.msra.mxu0 0
  %399 = vmatprep.subr.bf16.mxu0 0
  %400 = vmatpush1.bf16.msra.mxu0 0
  %401 = vmatprep.subr.bf16.mxu0 0
  %402 = vmatpush1.bf16.msra.mxu0 0
  %403 = vmatprep.subr.bf16.mxu0 0
  %404 = vmatpush1.bf16.msra.mxu0 0
  %405 = vmatprep.subr.bf16.mxu0 0
  %406 = vmatpush1.bf16.msra.mxu0 0
  %407 = vmatprep.subr.bf16.mxu0 0
  %408 = vmatpush1.bf16.msra.mxu0 0
  %409 = vmatprep.subr.bf16.mxu0 0
  %410 = vmatpush1.bf16.msra.mxu0 0
  %411 = vmatprep.mubr.bf16.mxu0 0
  %412 = vmatmul.mubr.bf16.gmra.mrb[0].mxu0 %v336
  %v413 = vpop.f32.mrb[0].mxu0
  %v414 = vadd.f32 0.0, %v413
  %v415 = vpop.f32.mrb[0].mxu0
  %v416 = vpop.f32.mrb[0].mxu0
  %v417 = vpop.f32.mrb[0].mxu0
  %418 = vdwg.mxu0
  %v419 = vadd.f32 %v134, %v373
  %v420 = vxor.u32 %v419, 2147483648
  %v421 = vmul.f32 %v420, 1.442695
  %v422 = vpow.pop %v421
  %v423 = vadd.f32 %v422, 1.0
  %v424 = vrcp.pop %v423
  %v425 = vmul.f32 1.0, %v424
  %v426 = vadd.f32 %v136, %v375
  %v427 = vxor.u32 %v426, 2147483648
  %v428 = vmul.f32 %v427, 1.442695
  %v429 = vpow.pop %v428
  %v430 = vadd.f32 %v429, 1.0
  %v431 = vrcp.pop %v430
  %v432 = vmul.f32 1.0, %v431
  %v433 = vadd.f32 %v414, %v39
  %v434 = vmul.f32 %v425, %v433
  %v435 = vadd.f32 %v184, %v434
  %v436 = vtanh.pop %v435
  %v437 = vsub.f32 1.0, %v432
  %v438 = vmul.f32 %v437, %v436
  %v439 = vmul.f32 %v432, %v333
  %v440 = vadd.f32 %v438, %v439
  %v441 = vpack.c.bf16 %v440, %v440
  %v443 = vsel %vm78, %v441, 0
  %445 = vmatprep.subr.bf16.mxu0 %v211
  %446 = vmatpush1.bf16.msra.mxu0 %v210
  %447 = vmatprep.subr.bf16.mxu0 %v226
  %448 = vmatpush1.bf16.msra.mxu0 %v223
  %449 = vmatprep.subr.bf16.mxu0 0
  %450 = vmatpush1.bf16.msra.mxu0 0
  %451 = vmatprep.subr.bf16.mxu0 0
  %452 = vmatpush1.bf16.msra.mxu0 0
  %453 = vmatprep.subr.bf16.mxu0 0
  %454 = vmatpush1.bf16.msra.mxu0 0
  %455 = vmatprep.subr.bf16.mxu0 0
  %456 = vmatpush1.bf16.msra.mxu0 0
  %457 = vmatprep.subr.bf16.mxu0 0
  %458 = vmatpush1.bf16.msra.mxu0 0
  %459 = vmatprep.subr.bf16.mxu0 0
  %460 = vmatpush1.bf16.msra.mxu0 0
  %461 = vmatprep.subr.bf16.mxu0 0
  %462 = vmatpush1.bf16.msra.mxu0 0
  %463 = vmatprep.subr.bf16.mxu0 0
  %464 = vmatpush1.bf16.msra.mxu0 0
  %465 = vmatprep.subr.bf16.mxu0 0
  %466 = vmatpush1.bf16.msra.mxu0 0
  %467 = vmatprep.subr.bf16.mxu0 0
  %468 = vmatpush1.bf16.msra.mxu0 0
  %469 = vmatprep.subr.bf16.mxu0 0
  %470 = vmatpush1.bf16.msra.mxu0 0
  %471 = vmatprep.subr.bf16.mxu0 0
  %472 = vmatpush1.bf16.msra.mxu0 0
  %473 = vmatprep.subr.bf16.mxu0 0
  %474 = vmatpush1.bf16.msra.mxu0 0
  %475 = vmatprep.subr.bf16.mxu0 0
  %476 = vmatpush1.bf16.msra.mxu0 0
  %477 = vmatprep.mubr.bf16.mxu0 0
  %478 = vmatmul.mubr.bf16.gmra.mrb[0].mxu0 %v443
  %v479 = vpop.f32.mrb[0].mxu0
  %v480 = vadd.f32 0.0, %v479
  %v481 = vpop.f32.mrb[0].mxu0
  %v482 = vadd.f32 0.0, %v481
  %v483 = vpop.f32.mrb[0].mxu0
  %v484 = vpop.f32.mrb[0].mxu0
  %485 = vdwg.mxu0
  %486 = vmatprep.subr.bf16.mxu0 0
  %487 = vmatpush1.bf16.msra.mxu0 %v212
  %488 = vmatprep.subr.bf16.mxu0 0
  %489 = vmatpush1.bf16.msra.mxu0 %v229
  %490 = vmatprep.subr.bf16.mxu0 0
  %491 = vmatpush1.bf16.msra.mxu0 0
  %492 = vmatprep.subr.bf16.mxu0 0
  %493 = vmatpush1.bf16.msra.mxu0 0
  %494 = vmatprep.subr.bf16.mxu0 0
  %495 = vmatpush1.bf16.msra.mxu0 0
  %496 = vmatprep.subr.bf16.mxu0 0
  %497 = vmatpush1.bf16.msra.mxu0 0
  %498 = vmatprep.subr.bf16.mxu0 0
  %499 = vmatpush1.bf16.msra.mxu0 0
  %500 = vmatprep.subr.bf16.mxu0 0
  %501 = vmatpush1.bf16.msra.mxu0 0
  %502 = vmatprep.subr.bf16.mxu0 0
  %503 = vmatpush1.bf16.msra.mxu0 0
  %504 = vmatprep.subr.bf16.mxu0 0
  %505 = vmatpush1.bf16.msra.mxu0 0
  %506 = vmatprep.subr.bf16.mxu0 0
  %507 = vmatpush1.bf16.msra.mxu0 0
  %508 = vmatprep.subr.bf16.mxu0 0
  %509 = vmatpush1.bf16.msra.mxu0 0
  %510 = vmatprep.subr.bf16.mxu0 0
  %511 = vmatpush1.bf16.msra.mxu0 0
  %512 = vmatprep.subr.bf16.mxu0 0
  %513 = vmatpush1.bf16.msra.mxu0 0
  %514 = vmatprep.subr.bf16.mxu0 0
  %515 = vmatpush1.bf16.msra.mxu0 0
  %516 = vmatprep.subr.bf16.mxu0 0
  %517 = vmatpush1.bf16.msra.mxu0 0
  %518 = vmatprep.mubr.bf16.mxu0 0
  %519 = vmatmul.mubr.bf16.gmra.mrb[0].mxu0 %v443
  %v520 = vpop.f32.mrb[0].mxu0
  %v521 = vadd.f32 0.0, %v520
  %v522 = vpop.f32.mrb[0].mxu0
  %v523 = vpop.f32.mrb[0].mxu0
  %v524 = vpop.f32.mrb[0].mxu0
  %525 = vdwg.mxu0
  %v526 = vadd.f32 %v140, %v480
  %v527 = vxor.u32 %v526, 2147483648
  %v528 = vmul.f32 %v527, 1.442695
  %v529 = vpow.pop %v528
  %v530 = vadd.f32 %v529, 1.0
  %v531 = vrcp.pop %v530
  %v532 = vmul.f32 1.0, %v531
  %v533 = vadd.f32 %v142, %v482
  %v534 = vxor.u32 %v533, 2147483648
  %v535 = vmul.f32 %v534, 1.442695
  %v536 = vpow.pop %v535
  %v537 = vadd.f32 %v536, 1.0
  %v538 = vrcp.pop %v537
  %v539 = vmul.f32 1.0, %v538
  %v540 = vadd.f32 %v521, %v39
  %v541 = vmul.f32 %v532, %v540
  %v542 = vadd.f32 %v189, %v541
  %v543 = vtanh.pop %v542
  %v544 = vsub.f32 1.0, %v539
  %v545 = vmul.f32 %v544, %v543
  %v546 = vmul.f32 %v539, %v440
  %v547 = vadd.f32 %v545, %v546
  %s548 = scalar_lea.vmem %s1, 36
  %v549 = vld [vmem:[%s548] sm:$0xff]
  %v550 = vld [vmem:[%s548 + $0x8] sm:$0xf]
  %v551 = vld [vmem:[%s548 + $0xc] sm:$0xff]
  %v552 = vld [vmem:[%s548 + $0x14] sm:$0xf]
  %v553 = vld [vmem:[%s548 + $0x18] sm:$0x33]
  %v554 = vld [vmem:[%s548 + $0x20] sm:$0x3]
  %s555 = scalar_lea.vmem %s1, 108
  %v556 = vld [vmem:[%s555] sm:$0xff]
  %v557 = vld [vmem:[%s555 + $0x8] sm:$0xf]
  %v558 = vld [vmem:[%s555 + $0xc] sm:$0xff]
  %v559 = vld [vmem:[%s555 + $0x14] sm:$0xf]
  %v560 = vld [vmem:[%s555 + $0x18] sm:$0x33]
  %v561 = vld [vmem:[%s555 + $0x20] sm:$0x3]
  %v562 = vlaneseq
  %v563 = vshrl.u32 %v562, 7
  %v564 = vsub.s32 3, %v563
  %v565 = vrot.slane %v15, %v564
  %v566 = vpack.c.bf16 %v440, %v333
  %v567 = vpack.c.bf16 %v547, %v547
  %v568 = vlaneseq
  %v569 = vshrl.u32 %v568, 7
  %v570 = vsub.s32 1, %v569
  %v571 = vrot.slane %v15, %v570
  %v572 = vlaneseq
  %v573 = vshrl.u32 %v572, 7
  %v574 = vsub.s32 1, %v573
  %v575 = vrot.slane %v16, %v574
  %v576 = vlaneseq
  %v577 = vshrl.u32 %v576, 7
  %v578 = vsub.s32 1, %v577
  %v579 = vrot.slane %v17, %v578
  %v586 = vunpack.c.l.b16 %v549
  %v587 = vunpack.c.h.b16 %v549
  %v588 = vunpack.c.l.b16 %v550
  %v589 = vunpack.c.l.b16 %v551
  %v590 = vunpack.c.h.b16 %v551
  %v591 = vunpack.c.l.b16 %v552
  %v592 = vunpack.c.l.b16 %v553
  %v593 = vunpack.c.h.b16 %v553
  %v594 = vunpack.c.l.b16 %v554
  %v595 = vpack.c.b16 %v589, %v586
  %v596 = vpack.c.b16 %v590, %v587
  %v597 = vpack.c.b16 %v591, %v588
  %v598 = vpack.c.b16 %v592, %v592
  %v599 = vpack.c.b16 %v593, %v593
  %v600 = vpack.c.b16 %v594, %v594
  %v605 = vsel %vm78, %v566, 0
  %v608 = vsel %vm78, %v567, 0
  %v611 = vsel %vm85, %v598, 0
  %v614 = vsel %vm85, %v599, 0
  %v617 = vsel %vm85, %v600, 0
  %619 = vmatprep.subr.bf16.mxu0 %v596
  %620 = vmatpush1.bf16.msra.mxu0 %v595
  %621 = vmatprep.subr.bf16.mxu0 %v614
  %622 = vmatpush1.bf16.msra.mxu0 %v611
  %623 = vmatprep.subr.bf16.mxu0 0
  %624 = vmatpush1.bf16.msra.mxu0 0
  %625 = vmatprep.subr.bf16.mxu0 0
  %626 = vmatpush1.bf16.msra.mxu0 0
  %627 = vmatprep.subr.bf16.mxu0 0
  %628 = vmatpush1.bf16.msra.mxu0 0
  %629 = vmatprep.subr.bf16.mxu0 0
  %630 = vmatpush1.bf16.msra.mxu0 0
  %631 = vmatprep.subr.bf16.mxu0 0
  %632 = vmatpush1.bf16.msra.mxu0 0
  %633 = vmatprep.subr.bf16.mxu0 0
  %634 = vmatpush1.bf16.msra.mxu0 0
  %635 = vmatprep.subr.bf16.mxu0 0
  %636 = vmatpush1.bf16.msra.mxu0 0
  %637 = vmatprep.subr.bf16.mxu0 0
  %638 = vmatpush1.bf16.msra.mxu0 0
  %639 = vmatprep.subr.bf16.mxu0 0
  %640 = vmatpush1.bf16.msra.mxu0 0
  %641 = vmatprep.subr.bf16.mxu0 0
  %642 = vmatpush1.bf16.msra.mxu0 0
  %643 = vmatprep.subr.bf16.mxu0 0
  %644 = vmatpush1.bf16.msra.mxu0 0
  %645 = vmatprep.subr.bf16.mxu0 0
  %646 = vmatpush1.bf16.msra.mxu0 0
  %647 = vmatprep.subr.bf16.mxu0 0
  %648 = vmatpush1.bf16.msra.mxu0 0
  %649 = vmatprep.subr.bf16.mxu0 0
  %650 = vmatpush1.bf16.msra.mxu0 0
  %651 = vmatprep.mubr.bf16.mxu0 0
  %652 = vmatmul.mubr.bf16.gmra.mrb[0].mxu0 %v605
  %v653 = vpop.f32.mrb[0].mxu0
  %v654 = vadd.f32 %v571, %v653
  %v655 = vpop.f32.mrb[0].mxu0
  %v656 = vadd.f32 %v575, %v655
  %v657 = vpop.f32.mrb[0].mxu0
  %v658 = vadd.f32 %v571, %v657
  %v659 = vpop.f32.mrb[0].mxu0
  %v660 = vadd.f32 %v575, %v659
  %661 = vmatprep.mubr.bf16.mxu0 0
  %662 = vmatmul.mubr.bf16.gmra.mrb[0].mxu0 %v608
  %v663 = vpop.f32.mrb[0].mxu0
  %v664 = vadd.f32 %v571, %v663
  %v665 = vpop.f32.mrb[0].mxu0
  %v666 = vadd.f32 %v575, %v665
  %v667 = vpop.f32.mrb[0].mxu0
  %v668 = vpop.f32.mrb[0].mxu0
  %669 = vdwg.mxu0
  %670 = vmatprep.subr.bf16.mxu0 0
  %671 = vmatpush1.bf16.msra.mxu0 %v597
  %672 = vmatprep.subr.bf16.mxu0 0
  %673 = vmatpush1.bf16.msra.mxu0 %v617
  %674 = vmatprep.subr.bf16.mxu0 0
  %675 = vmatpush1.bf16.msra.mxu0 0
  %676 = vmatprep.subr.bf16.mxu0 0
  %677 = vmatpush1.bf16.msra.mxu0 0
  %678 = vmatprep.subr.bf16.mxu0 0
  %679 = vmatpush1.bf16.msra.mxu0 0
  %680 = vmatprep.subr.bf16.mxu0 0
  %681 = vmatpush1.bf16.msra.mxu0 0
  %682 = vmatprep.subr.bf16.mxu0 0
  %683 = vmatpush1.bf16.msra.mxu0 0
  %684 = vmatprep.subr.bf16.mxu0 0
  %685 = vmatpush1.bf16.msra.mxu0 0
  %686 = vmatprep.subr.bf16.mxu0 0
  %687 = vmatpush1.bf16.msra.mxu0 0
  %688 = vmatprep.subr.bf16.mxu0 0
  %689 = vmatpush1.bf16.msra.mxu0 0
  %690 = vmatprep.subr.bf16.mxu0 0
  %691 = vmatpush1.bf16.msra.mxu0 0
  %692 = vmatprep.subr.bf16.mxu0 0
  %693 = vmatpush1.bf16.msra.mxu0 0
  %694 = vmatprep.subr.bf16.mxu0 0
  %695 = vmatpush1.bf16.msra.mxu0 0
  %696 = vmatprep.subr.bf16.mxu0 0
  %697 = vmatpush1.bf16.msra.mxu0 0
  %698 = vmatprep.subr.bf16.mxu0 0
  %699 = vmatpush1.bf16.msra.mxu0 0
  %700 = vmatprep.subr.bf16.mxu0 0
  %701 = vmatpush1.bf16.msra.mxu0 0
  %702 = vmatprep.mubr.bf16.mxu0 0
  %703 = vmatmul.mubr.bf16.gmra.mrb[0].mxu0 %v605
  %v704 = vpop.f32.mrb[0].mxu0
  %v705 = vadd.f32 %v579, %v704
  %v706 = vpop.f32.mrb[0].mxu0
  %v707 = vpop.f32.mrb[0].mxu0
  %v708 = vadd.f32 %v579, %v707
  %v709 = vpop.f32.mrb[0].mxu0
  %710 = vmatprep.mubr.bf16.mxu0 0
  %711 = vmatmul.mubr.bf16.gmra.mrb[0].mxu0 %v608
  %v712 = vpop.f32.mrb[0].mxu0
  %v713 = vadd.f32 %v579, %v712
  %v714 = vpop.f32.mrb[0].mxu0
  %v715 = vpop.f32.mrb[0].mxu0
  %v716 = vpop.f32.mrb[0].mxu0
  %717 = vdwg.mxu0
  %v718 = vpack.c.bf16 %v22, %v22
  %v725 = vunpack.c.l.b16 %v556
  %v726 = vunpack.c.h.b16 %v556
  %v727 = vunpack.c.l.b16 %v557
  %v728 = vunpack.c.l.b16 %v558
  %v729 = vunpack.c.h.b16 %v558
  %v730 = vunpack.c.l.b16 %v559
  %v731 = vunpack.c.l.b16 %v560
  %v732 = vunpack.c.h.b16 %v560
  %v733 = vunpack.c.l.b16 %v561
  %v734 = vpack.c.b16 %v728, %v725
  %v735 = vpack.c.b16 %v729, %v726
  %v736 = vpack.c.b16 %v730, %v727
  %v737 = vpack.c.b16 %v731, %v731
  %v738 = vpack.c.b16 %v732, %v732
  %v739 = vpack.c.b16 %v733, %v733
  %v744 = vsel %vm78, %v718, 0
  %v747 = vsel %vm85, %v737, 0
  %v750 = vsel %vm85, %v738, 0
  %v753 = vsel %vm85, %v739, 0
  %755 = vmatprep.subr.bf16.mxu0 %v735
  %756 = vmatpush1.bf16.msra.mxu0 %v734
  %757 = vmatprep.subr.bf16.mxu0 %v750
  %758 = vmatpush1.bf16.msra.mxu0 %v747
  %759 = vmatprep.subr.bf16.mxu0 0
  %760 = vmatpush1.bf16.msra.mxu0 0
  %761 = vmatprep.subr.bf16.mxu0 0
  %762 = vmatpush1.bf16.msra.mxu0 0
  %763 = vmatprep.subr.bf16.mxu0 0
  %764 = vmatpush1.bf16.msra.mxu0 0
  %765 = vmatprep.subr.bf16.mxu0 0
  %766 = vmatpush1.bf16.msra.mxu0 0
  %767 = vmatprep.subr.bf16.mxu0 0
  %768 = vmatpush1.bf16.msra.mxu0 0
  %769 = vmatprep.subr.bf16.mxu0 0
  %770 = vmatpush1.bf16.msra.mxu0 0
  %771 = vmatprep.subr.bf16.mxu0 0
  %772 = vmatpush1.bf16.msra.mxu0 0
  %773 = vmatprep.subr.bf16.mxu0 0
  %774 = vmatpush1.bf16.msra.mxu0 0
  %775 = vmatprep.subr.bf16.mxu0 0
  %776 = vmatpush1.bf16.msra.mxu0 0
  %777 = vmatprep.subr.bf16.mxu0 0
  %778 = vmatpush1.bf16.msra.mxu0 0
  %779 = vmatprep.subr.bf16.mxu0 0
  %780 = vmatpush1.bf16.msra.mxu0 0
  %781 = vmatprep.subr.bf16.mxu0 0
  %782 = vmatpush1.bf16.msra.mxu0 0
  %783 = vmatprep.subr.bf16.mxu0 0
  %784 = vmatpush1.bf16.msra.mxu0 0
  %785 = vmatprep.subr.bf16.mxu0 0
  %786 = vmatpush1.bf16.msra.mxu0 0
  %787 = vmatprep.mubr.bf16.mxu0 0
  %788 = vmatmul.mubr.bf16.gmra.mrb[0].mxu0 %v744
  %v789 = vpop.f32.mrb[0].mxu0
  %v790 = vadd.f32 0.0, %v789
  %v791 = vpop.f32.mrb[0].mxu0
  %v792 = vadd.f32 0.0, %v791
  %v793 = vpop.f32.mrb[0].mxu0
  %v794 = vpop.f32.mrb[0].mxu0
  %795 = vdwg.mxu0
  %796 = vmatprep.subr.bf16.mxu0 0
  %797 = vmatpush1.bf16.msra.mxu0 %v736
  %798 = vmatprep.subr.bf16.mxu0 0
  %799 = vmatpush1.bf16.msra.mxu0 %v753
  %800 = vmatprep.subr.bf16.mxu0 0
  %801 = vmatpush1.bf16.msra.mxu0 0
  %802 = vmatprep.subr.bf16.mxu0 0
  %803 = vmatpush1.bf16.msra.mxu0 0
  %804 = vmatprep.subr.bf16.mxu0 0
  %805 = vmatpush1.bf16.msra.mxu0 0
  %806 = vmatprep.subr.bf16.mxu0 0
  %807 = vmatpush1.bf16.msra.mxu0 0
  %808 = vmatprep.subr.bf16.mxu0 0
  %809 = vmatpush1.bf16.msra.mxu0 0
  %810 = vmatprep.subr.bf16.mxu0 0
  %811 = vmatpush1.bf16.msra.mxu0 0
  %812 = vmatprep.subr.bf16.mxu0 0
  %813 = vmatpush1.bf16.msra.mxu0 0
  %814 = vmatprep.subr.bf16.mxu0 0
  %815 = vmatpush1.bf16.msra.mxu0 0
  %816 = vmatprep.subr.bf16.mxu0 0
  %817 = vmatpush1.bf16.msra.mxu0 0
  %818 = vmatprep.subr.bf16.mxu0 0
  %819 = vmatpush1.bf16.msra.mxu0 0
  %820 = vmatprep.subr.bf16.mxu0 0
  %821 = vmatpush1.bf16.msra.mxu0 0
  %822 = vmatprep.subr.bf16.mxu0 0
  %823 = vmatpush1.bf16.msra.mxu0 0
  %824 = vmatprep.subr.bf16.mxu0 0
  %825 = vmatpush1.bf16.msra.mxu0 0
  %826 = vmatprep.subr.bf16.mxu0 0
  %827 = vmatpush1.bf16.msra.mxu0 0
  %828 = vmatprep.mubr.bf16.mxu0 0
  %829 = vmatmul.mubr.bf16.gmra.mrb[0].mxu0 %v744
  %v830 = vpop.f32.mrb[0].mxu0
  %v831 = vadd.f32 0.0, %v830
  %v832 = vpop.f32.mrb[0].mxu0
  %v833 = vpop.f32.mrb[0].mxu0
  %v834 = vpop.f32.mrb[0].mxu0
  %835 = vdwg.mxu0
  %v836 = vadd.f32 %v654, %v790
  %v837 = vxor.u32 %v836, 2147483648
  %v838 = vmul.f32 %v837, 1.442695
  %v839 = vpow.pop %v838
  %v840 = vadd.f32 %v839, 1.0
  %v841 = vrcp.pop %v840
  %v842 = vmul.f32 1.0, %v841
  %v843 = vadd.f32 %v656, %v792
  %v844 = vxor.u32 %v843, 2147483648
  %v845 = vmul.f32 %v844, 1.442695
  %v846 = vpow.pop %v845
  %v847 = vadd.f32 %v846, 1.0
  %v848 = vrcp.pop %v847
  %v849 = vmul.f32 1.0, %v848
  %v850 = vadd.f32 %v831, %v565
  %v851 = vmul.f32 %v842, %v850
  %v852 = vadd.f32 %v705, %v851
  %v853 = vtanh.pop %v852
  %v854 = vsub.f32 1.0, %v849
  %v855 = vmul.f32 %v854, %v853
  %v856 = vmul.f32 %v849, %v22
  %v857 = vadd.f32 %v855, %v856
  %v858 = vpack.c.bf16 %v857, %v857
  %v860 = vsel %vm78, %v858, 0
  %862 = vmatprep.subr.bf16.mxu0 %v735
  %863 = vmatpush1.bf16.msra.mxu0 %v734
  %864 = vmatprep.subr.bf16.mxu0 %v750
  %865 = vmatpush1.bf16.msra.mxu0 %v747
  %866 = vmatprep.subr.bf16.mxu0 0
  %867 = vmatpush1.bf16.msra.mxu0 0
  %868 = vmatprep.subr.bf16.mxu0 0
  %869 = vmatpush1.bf16.msra.mxu0 0
  %870 = vmatprep.subr.bf16.mxu0 0
  %871 = vmatpush1.bf16.msra.mxu0 0
  %872 = vmatprep.subr.bf16.mxu0 0
  %873 = vmatpush1.bf16.msra.mxu0 0
  %874 = vmatprep.subr.bf16.mxu0 0
  %875 = vmatpush1.bf16.msra.mxu0 0
  %876 = vmatprep.subr.bf16.mxu0 0
  %877 = vmatpush1.bf16.msra.mxu0 0
  %878 = vmatprep.subr.bf16.mxu0 0
  %879 = vmatpush1.bf16.msra.mxu0 0
  %880 = vmatprep.subr.bf16.mxu0 0
  %881 = vmatpush1.bf16.msra.mxu0 0
  %882 = vmatprep.subr.bf16.mxu0 0
  %883 = vmatpush1.bf16.msra.mxu0 0
  %884 = vmatprep.subr.bf16.mxu0 0
  %885 = vmatpush1.bf16.msra.mxu0 0
  %886 = vmatprep.subr.bf16.mxu0 0
  %887 = vmatpush1.bf16.msra.mxu0 0
  %888 = vmatprep.subr.bf16.mxu0 0
  %889 = vmatpush1.bf16.msra.mxu0 0
  %890 = vmatprep.subr.bf16.mxu0 0
  %891 = vmatpush1.bf16.msra.mxu0 0
  %892 = vmatprep.subr.bf16.mxu0 0
  %893 = vmatpush1.bf16.msra.mxu0 0
  %894 = vmatprep.mubr.bf16.mxu0 0
  %895 = vmatmul.mubr.bf16.gmra.mrb[0].mxu0 %v860
  %v896 = vpop.f32.mrb[0].mxu0
  %v897 = vadd.f32 0.0, %v896
  %v898 = vpop.f32.mrb[0].mxu0
  %v899 = vadd.f32 0.0, %v898
  %v900 = vpop.f32.mrb[0].mxu0
  %v901 = vpop.f32.mrb[0].mxu0
  %902 = vdwg.mxu0
  %903 = vmatprep.subr.bf16.mxu0 0
  %904 = vmatpush1.bf16.msra.mxu0 %v736
  %905 = vmatprep.subr.bf16.mxu0 0
  %906 = vmatpush1.bf16.msra.mxu0 %v753
  %907 = vmatprep.subr.bf16.mxu0 0
  %908 = vmatpush1.bf16.msra.mxu0 0
  %909 = vmatprep.subr.bf16.mxu0 0
  %910 = vmatpush1.bf16.msra.mxu0 0
  %911 = vmatprep.subr.bf16.mxu0 0
  %912 = vmatpush1.bf16.msra.mxu0 0
  %913 = vmatprep.subr.bf16.mxu0 0
  %914 = vmatpush1.bf16.msra.mxu0 0
  %915 = vmatprep.subr.bf16.mxu0 0
  %916 = vmatpush1.bf16.msra.mxu0 0
  %917 = vmatprep.subr.bf16.mxu0 0
  %918 = vmatpush1.bf16.msra.mxu0 0
  %919 = vmatprep.subr.bf16.mxu0 0
  %920 = vmatpush1.bf16.msra.mxu0 0
  %921 = vmatprep.subr.bf16.mxu0 0
  %922 = vmatpush1.bf16.msra.mxu0 0
  %923 = vmatprep.subr.bf16.mxu0 0
  %924 = vmatpush1.bf16.msra.mxu0 0
  %925 = vmatprep.subr.bf16.mxu0 0
  %926 = vmatpush1.bf16.msra.mxu0 0
  %927 = vmatprep.subr.bf16.mxu0 0
  %928 = vmatpush1.bf16.msra.mxu0 0
  %929 = vmatprep.subr.bf16.mxu0 0
  %930 = vmatpush1.bf16.msra.mxu0 0
  %931 = vmatprep.subr.bf16.mxu0 0
  %932 = vmatpush1.bf16.msra.mxu0 0
  %933 = vmatprep.subr.bf16.mxu0 0
  %934 = vmatpush1.bf16.msra.mxu0 0
  %935 = vmatprep.mubr.bf16.mxu0 0
  %936 = vmatmul.mubr.bf16.gmra.mrb[0].mxu0 %v860
  %v937 = vpop.f32.mrb[0].mxu0
  %v938 = vadd.f32 0.0, %v937
  %v939 = vpop.f32.mrb[0].mxu0
  %v940 = vpop.f32.mrb[0].mxu0
  %v941 = vpop.f32.mrb[0].mxu0
  %942 = vdwg.mxu0
  %v943 = vadd.f32 %v658, %v897
  %v944 = vxor.u32 %v943, 2147483648
  %v945 = vmul.f32 %v944, 1.442695
  %v946 = vpow.pop %v945
  %v947 = vadd.f32 %v946, 1.0
  %v948 = vrcp.pop %v947
  %v949 = vmul.f32 1.0, %v948
  %v950 = vadd.f32 %v660, %v899
  %v951 = vxor.u32 %v950, 2147483648
  %v952 = vmul.f32 %v951, 1.442695
  %v953 = vpow.pop %v952
  %v954 = vadd.f32 %v953, 1.0
  %v955 = vrcp.pop %v954
  %v956 = vmul.f32 1.0, %v955
  %v957 = vadd.f32 %v938, %v565
  %v958 = vmul.f32 %v949, %v957
  %v959 = vadd.f32 %v708, %v958
  %v960 = vtanh.pop %v959
  %v961 = vsub.f32 1.0, %v956
  %v962 = vmul.f32 %v961, %v960
  %v963 = vmul.f32 %v956, %v857
  %v964 = vadd.f32 %v962, %v963
  %v965 = vpack.c.bf16 %v964, %v964
  %v967 = vsel %vm78, %v965, 0
  %969 = vmatprep.subr.bf16.mxu0 %v735
  %970 = vmatpush1.bf16.msra.mxu0 %v734
  %971 = vmatprep.subr.bf16.mxu0 %v750
  %972 = vmatpush1.bf16.msra.mxu0 %v747
  %973 = vmatprep.subr.bf16.mxu0 0
  %974 = vmatpush1.bf16.msra.mxu0 0
  %975 = vmatprep.subr.bf16.mxu0 0
  %976 = vmatpush1.bf16.msra.mxu0 0
  %977 = vmatprep.subr.bf16.mxu0 0
  %978 = vmatpush1.bf16.msra.mxu0 0
  %979 = vmatprep.subr.bf16.mxu0 0
  %980 = vmatpush1.bf16.msra.mxu0 0
  %981 = vmatprep.subr.bf16.mxu0 0
  %982 = vmatpush1.bf16.msra.mxu0 0
  %983 = vmatprep.subr.bf16.mxu0 0
  %984 = vmatpush1.bf16.msra.mxu0 0
  %985 = vmatprep.subr.bf16.mxu0 0
  %986 = vmatpush1.bf16.msra.mxu0 0
  %987 = vmatprep.subr.bf16.mxu0 0
  %988 = vmatpush1.bf16.msra.mxu0 0
  %989 = vmatprep.subr.bf16.mxu0 0
  %990 = vmatpush1.bf16.msra.mxu0 0
  %991 = vmatprep.subr.bf16.mxu0 0
  %992 = vmatpush1.bf16.msra.mxu0 0
  %993 = vmatprep.subr.bf16.mxu0 0
  %994 = vmatpush1.bf16.msra.mxu0 0
  %995 = vmatprep.subr.bf16.mxu0 0
  %996 = vmatpush1.bf16.msra.mxu0 0
  %997 = vmatprep.subr.bf16.mxu0 0
  %998 = vmatpush1.bf16.msra.mxu0 0
  %999 = vmatprep.subr.bf16.mxu0 0
  %1000 = vmatpush1.bf16.msra.mxu0 0
  %1001 = vmatprep.mubr.bf16.mxu0 0
  %1002 = vmatmul.mubr.bf16.gmra.mrb[0].mxu0 %v967
  %v1003 = vpop.f32.mrb[0].mxu0
  %v1004 = vadd.f32 0.0, %v1003
  %v1005 = vpop.f32.mrb[0].mxu0
  %v1006 = vadd.f32 0.0, %v1005
  %v1007 = vpop.f32.mrb[0].mxu0
  %v1008 = vpop.f32.mrb[0].mxu0
  %1009 = vdwg.mxu0
  %1010 = vmatprep.subr.bf16.mxu0 0
  %1011 = vmatpush1.bf16.msra.mxu0 %v736
  %1012 = vmatprep.subr.bf16.mxu0 0
  %1013 = vmatpush1.bf16.msra.mxu0 %v753
  %1014 = vmatprep.subr.bf16.mxu0 0
  %1015 = vmatpush1.bf16.msra.mxu0 0
  %1016 = vmatprep.subr.bf16.mxu0 0
  %1017 = vmatpush1.bf16.msra.mxu0 0
  %1018 = vmatprep.subr.bf16.mxu0 0
  %1019 = vmatpush1.bf16.msra.mxu0 0
  %1020 = vmatprep.subr.bf16.mxu0 0
  %1021 = vmatpush1.bf16.msra.mxu0 0
  %1022 = vmatprep.subr.bf16.mxu0 0
  %1023 = vmatpush1.bf16.msra.mxu0 0
  %1024 = vmatprep.subr.bf16.mxu0 0
  %1025 = vmatpush1.bf16.msra.mxu0 0
  %1026 = vmatprep.subr.bf16.mxu0 0
  %1027 = vmatpush1.bf16.msra.mxu0 0
  %1028 = vmatprep.subr.bf16.mxu0 0
  %1029 = vmatpush1.bf16.msra.mxu0 0
  %1030 = vmatprep.subr.bf16.mxu0 0
  %1031 = vmatpush1.bf16.msra.mxu0 0
  %1032 = vmatprep.subr.bf16.mxu0 0
  %1033 = vmatpush1.bf16.msra.mxu0 0
  %1034 = vmatprep.subr.bf16.mxu0 0
  %1035 = vmatpush1.bf16.msra.mxu0 0
  %1036 = vmatprep.subr.bf16.mxu0 0
  %1037 = vmatpush1.bf16.msra.mxu0 0
  %1038 = vmatprep.subr.bf16.mxu0 0
  %1039 = vmatpush1.bf16.msra.mxu0 0
  %1040 = vmatprep.subr.bf16.mxu0 0
  %1041 = vmatpush1.bf16.msra.mxu0 0
  %1042 = vmatprep.mubr.bf16.mxu0 0
  %1043 = vmatmul.mubr.bf16.gmra.mrb[0].mxu0 %v967
  %v1044 = vpop.f32.mrb[0].mxu0
  %v1045 = vadd.f32 0.0, %v1044
  %v1046 = vpop.f32.mrb[0].mxu0
  %v1047 = vpop.f32.mrb[0].mxu0
  %v1048 = vpop.f32.mrb[0].mxu0
  %1049 = vdwg.mxu0
  %v1050 = vadd.f32 %v664, %v1004
  %v1051 = vxor.u32 %v1050, 2147483648
  %v1052 = vmul.f32 %v1051, 1.442695
  %v1053 = vpow.pop %v1052
  %v1054 = vadd.f32 %v1053, 1.0
  %v1055 = vrcp.pop %v1054
  %v1056 = vmul.f32 1.0, %v1055
  %v1057 = vadd.f32 %v666, %v1006
  %v1058 = vxor.u32 %v1057, 2147483648
  %v1059 = vmul.f32 %v1058, 1.442695
  %v1060 = vpow.pop %v1059
  %v1061 = vadd.f32 %v1060, 1.0
  %v1062 = vrcp.pop %v1061
  %v1063 = vmul.f32 1.0, %v1062
  %v1064 = vadd.f32 %v1045, %v565
  %v1065 = vmul.f32 %v1056, %v1064
  %v1066 = vadd.f32 %v713, %v1065
  %v1067 = vtanh.pop %v1066
  %v1068 = vsub.f32 1.0, %v1063
  %v1069 = vmul.f32 %v1068, %v1067
  %v1070 = vmul.f32 %v1063, %v964
  %v1071 = vadd.f32 %v1069, %v1070
  %v1072 = vpack.c.bf16 %v964, %v857
  %v1073 = vpack.c.bf16 %v1071, %v1071
  %v1075 = vsel %vm78, %v1072, 0
  %v1078 = vsel %vm78, %v1073, 0
  %1080 = vmatprep.subr.bf16.mxu0 %v70
  %1081 = vmatpush1.bf16.msra.mxu0 %v69
  %1082 = vmatprep.subr.bf16.mxu0 %v90
  %1083 = vmatpush1.bf16.msra.mxu0 %v87
  %1084 = vmatprep.subr.bf16.mxu0 0
  %1085 = vmatpush1.bf16.msra.mxu0 0
  %1086 = vmatprep.subr.bf16.mxu0 0
  %1087 = vmatpush1.bf16.msra.mxu0 0
  %1088 = vmatprep.subr.bf16.mxu0 0
  %1089 = vmatpush1.bf16.msra.mxu0 0
  %1090 = vmatprep.subr.bf16.mxu0 0
  %1091 = vmatpush1.bf16.msra.mxu0 0
  %1092 = vmatprep.subr.bf16.mxu0 0
  %1093 = vmatpush1.bf16.msra.mxu0 0
  %1094 = vmatprep.subr.bf16.mxu0 0
  %1095 = vmatpush1.bf16.msra.mxu0 0
  %1096 = vmatprep.subr.bf16.mxu0 0
  %1097 = vmatpush1.bf16.msra.mxu0 0
  %1098 = vmatprep.subr.bf16.mxu0 0
  %1099 = vmatpush1.bf16.msra.mxu0 0
  %1100 = vmatprep.subr.bf16.mxu0 0
  %1101 = vmatpush1.bf16.msra.mxu0 0
  %1102 = vmatprep.subr.bf16.mxu0 0
  %1103 = vmatpush1.bf16.msra.mxu0 0
  %1104 = vmatprep.subr.bf16.mxu0 0
  %1105 = vmatpush1.bf16.msra.mxu0 0
  %1106 = vmatprep.subr.bf16.mxu0 0
  %1107 = vmatpush1.bf16.msra.mxu0 0
  %1108 = vmatprep.subr.bf16.mxu0 0
  %1109 = vmatpush1.bf16.msra.mxu0 0
  %1110 = vmatprep.subr.bf16.mxu0 0
  %1111 = vmatpush1.bf16.msra.mxu0 0
  %1112 = vmatprep.mubr.bf16.mxu0 0
  %1113 = vmatmul.mubr.bf16.gmra.mrb[0].mxu0 %v1075
  %v1114 = vpop.f32.mrb[0].mxu0
  %v1115 = vadd.f32 %v45, %v1114
  %v1116 = vpop.f32.mrb[0].mxu0
  %v1117 = vadd.f32 %v49, %v1116
  %v1118 = vpop.f32.mrb[0].mxu0
  %v1119 = vadd.f32 %v45, %v1118
  %v1120 = vpop.f32.mrb[0].mxu0
  %v1121 = vadd.f32 %v49, %v1120
  %1122 = vmatprep.mubr.bf16.mxu0 0
  %1123 = vmatmul.mubr.bf16.gmra.mrb[0].mxu0 %v1078
  %v1124 = vpop.f32.mrb[0].mxu0
  %v1125 = vadd.f32 %v45, %v1124
  %v1126 = vpop.f32.mrb[0].mxu0
  %v1127 = vadd.f32 %v49, %v1126
  %v1128 = vpop.f32.mrb[0].mxu0
  %v1129 = vpop.f32.mrb[0].mxu0
  %1130 = vdwg.mxu0
  %1131 = vmatprep.subr.bf16.mxu0 0
  %1132 = vmatpush1.bf16.msra.mxu0 %v71
  %1133 = vmatprep.subr.bf16.mxu0 0
  %1134 = vmatpush1.bf16.msra.mxu0 %v93
  %1135 = vmatprep.subr.bf16.mxu0 0
  %1136 = vmatpush1.bf16.msra.mxu0 0
  %1137 = vmatprep.subr.bf16.mxu0 0
  %1138 = vmatpush1.bf16.msra.mxu0 0
  %1139 = vmatprep.subr.bf16.mxu0 0
  %1140 = vmatpush1.bf16.msra.mxu0 0
  %1141 = vmatprep.subr.bf16.mxu0 0
  %1142 = vmatpush1.bf16.msra.mxu0 0
  %1143 = vmatprep.subr.bf16.mxu0 0
  %1144 = vmatpush1.bf16.msra.mxu0 0
  %1145 = vmatprep.subr.bf16.mxu0 0
  %1146 = vmatpush1.bf16.msra.mxu0 0
  %1147 = vmatprep.subr.bf16.mxu0 0
  %1148 = vmatpush1.bf16.msra.mxu0 0
  %1149 = vmatprep.subr.bf16.mxu0 0
  %1150 = vmatpush1.bf16.msra.mxu0 0
  %1151 = vmatprep.subr.bf16.mxu0 0
  %1152 = vmatpush1.bf16.msra.mxu0 0
  %1153 = vmatprep.subr.bf16.mxu0 0
  %1154 = vmatpush1.bf16.msra.mxu0 0
  %1155 = vmatprep.subr.bf16.mxu0 0
  %1156 = vmatpush1.bf16.msra.mxu0 0
  %1157 = vmatprep.subr.bf16.mxu0 0
  %1158 = vmatpush1.bf16.msra.mxu0 0
  %1159 = vmatprep.subr.bf16.mxu0 0
  %1160 = vmatpush1.bf16.msra.mxu0 0
  %1161 = vmatprep.subr.bf16.mxu0 0
  %1162 = vmatpush1.bf16.msra.mxu0 0
  %1163 = vmatprep.mubr.bf16.mxu0 0
  %1164 = vmatmul.mubr.bf16.gmra.mrb[0].mxu0 %v1075
  %v1165 = vpop.f32.mrb[0].mxu0
  %v1166 = vadd.f32 %v53, %v1165
  %v1167 = vpop.f32.mrb[0].mxu0
  %v1168 = vpop.f32.mrb[0].mxu0
  %v1169 = vadd.f32 %v53, %v1168
  %v1170 = vpop.f32.mrb[0].mxu0
  %1171 = vmatprep.mubr.bf16.mxu0 0
  %1172 = vmatmul.mubr.bf16.gmra.mrb[0].mxu0 %v1078
  %v1173 = vpop.f32.mrb[0].mxu0
  %v1174 = vadd.f32 %v53, %v1173
  %v1175 = vpop.f32.mrb[0].mxu0
  %v1176 = vpop.f32.mrb[0].mxu0
  %v1177 = vpop.f32.mrb[0].mxu0
  %1178 = vdwg.mxu0
  %v1179 = vxor.u32 %v1115, 2147483648
  %v1180 = vmul.f32 %v1179, 1.442695
  %v1181 = vpow.pop %v1180
  %v1182 = vadd.f32 %v1181, 1.0
  %v1183 = vrcp.pop %v1182
  %v1184 = vmul.f32 1.0, %v1183
  %v1185 = vxor.u32 %v1117, 2147483648
  %v1186 = vmul.f32 %v1185, 1.442695
  %v1187 = vpow.pop %v1186
  %v1188 = vadd.f32 %v1187, 1.0
  %v1189 = vrcp.pop %v1188
  %v1190 = vmul.f32 1.0, %v1189
  %v1191 = vmul.f32 %v1184, %v39
  %v1192 = vadd.f32 %v1166, %v1191
  %v1193 = vtanh.pop %v1192
  %v1194 = vsub.f32 1.0, %v1190
  %v1195 = vmul.f32 %v1194, %v1193
  %v1196 = vpack.c.bf16 %v1195, %v1195
  %v1198 = vsel %vm78, %v1196, 0
  %1200 = vmatprep.subr.bf16.mxu0 %v211
  %1201 = vmatpush1.bf16.msra.mxu0 %v210
  %1202 = vmatprep.subr.bf16.mxu0 %v226
  %1203 = vmatpush1.bf16.msra.mxu0 %v223
  %1204 = vmatprep.subr.bf16.mxu0 0
  %1205 = vmatpush1.bf16.msra.mxu0 0
  %1206 = vmatprep.subr.bf16.mxu0 0
  %1207 = vmatpush1.bf16.msra.mxu0 0
  %1208 = vmatprep.subr.bf16.mxu0 0
  %1209 = vmatpush1.bf16.msra.mxu0 0
  %1210 = vmatprep.subr.bf16.mxu0 0
  %1211 = vmatpush1.bf16.msra.mxu0 0
  %1212 = vmatprep.subr.bf16.mxu0 0
  %1213 = vmatpush1.bf16.msra.mxu0 0
  %1214 = vmatprep.subr.bf16.mxu0 0
  %1215 = vmatpush1.bf16.msra.mxu0 0
  %1216 = vmatprep.subr.bf16.mxu0 0
  %1217 = vmatpush1.bf16.msra.mxu0 0
  %1218 = vmatprep.subr.bf16.mxu0 0
  %1219 = vmatpush1.bf16.msra.mxu0 0
  %1220 = vmatprep.subr.bf16.mxu0 0
  %1221 = vmatpush1.bf16.msra.mxu0 0
  %1222 = vmatprep.subr.bf16.mxu0 0
  %1223 = vmatpush1.bf16.msra.mxu0 0
  %1224 = vmatprep.subr.bf16.mxu0 0
  %1225 = vmatpush1.bf16.msra.mxu0 0
  %1226 = vmatprep.subr.bf16.mxu0 0
  %1227 = vmatpush1.bf16.msra.mxu0 0
  %1228 = vmatprep.subr.bf16.mxu0 0
  %1229 = vmatpush1.bf16.msra.mxu0 0
  %1230 = vmatprep.subr.bf16.mxu0 0
  %1231 = vmatpush1.bf16.msra.mxu0 0
  %1232 = vmatprep.mubr.bf16.mxu0 0
  %1233 = vmatmul.mubr.bf16.gmra.mrb[0].mxu0 %v1198
  %v1234 = vpop.f32.mrb[0].mxu0
  %v1235 = vadd.f32 0.0, %v1234
  %v1236 = vpop.f32.mrb[0].mxu0
  %v1237 = vadd.f32 0.0, %v1236
  %v1238 = vpop.f32.mrb[0].mxu0
  %v1239 = vpop.f32.mrb[0].mxu0
  %1240 = vdwg.mxu0
  %1241 = vmatprep.subr.bf16.mxu0 0
  %1242 = vmatpush1.bf16.msra.mxu0 %v212
  %1243 = vmatprep.subr.bf16.mxu0 0
  %1244 = vmatpush1.bf16.msra.mxu0 %v229
  %1245 = vmatprep.subr.bf16.mxu0 0
  %1246 = vmatpush1.bf16.msra.mxu0 0
  %1247 = vmatprep.subr.bf16.mxu0 0
  %1248 = vmatpush1.bf16.msra.mxu0 0
  %1249 = vmatprep.subr.bf16.mxu0 0
  %1250 = vmatpush1.bf16.msra.mxu0 0
  %1251 = vmatprep.subr.bf16.mxu0 0
  %1252 = vmatpush1.bf16.msra.mxu0 0
  %1253 = vmatprep.subr.bf16.mxu0 0
  %1254 = vmatpush1.bf16.msra.mxu0 0
  %1255 = vmatprep.subr.bf16.mxu0 0
  %1256 = vmatpush1.bf16.msra.mxu0 0
  %1257 = vmatprep.subr.bf16.mxu0 0
  %1258 = vmatpush1.bf16.msra.mxu0 0
  %1259 = vmatprep.subr.bf16.mxu0 0
  %1260 = vmatpush1.bf16.msra.mxu0 0
  %1261 = vmatprep.subr.bf16.mxu0 0
  %1262 = vmatpush1.bf16.msra.mxu0 0
  %1263 = vmatprep.subr.bf16.mxu0 0
  %1264 = vmatpush1.bf16.msra.mxu0 0
  %1265 = vmatprep.subr.bf16.mxu0 0
  %1266 = vmatpush1.bf16.msra.mxu0 0
  %1267 = vmatprep.subr.bf16.mxu0 0
  %1268 = vmatpush1.bf16.msra.mxu0 0
  %1269 = vmatprep.subr.bf16.mxu0 0
  %1270 = vmatpush1.bf16.msra.mxu0 0
  %1271 = vmatprep.subr.bf16.mxu0 0
  %1272 = vmatpush1.bf16.msra.mxu0 0
  %1273 = vmatprep.mubr.bf16.mxu0 0
  %1274 = vmatmul.mubr.bf16.gmra.mrb[0].mxu0 %v1198
  %v1275 = vpop.f32.mrb[0].mxu0
  %v1276 = vadd.f32 0.0, %v1275
  %v1277 = vpop.f32.mrb[0].mxu0
  %v1278 = vpop.f32.mrb[0].mxu0
  %v1279 = vpop.f32.mrb[0].mxu0
  %1280 = vdwg.mxu0
  %v1281 = vadd.f32 %v1119, %v1235
  %v1282 = vxor.u32 %v1281, 2147483648
  %v1283 = vmul.f32 %v1282, 1.442695
  %v1284 = vpow.pop %v1283
  %v1285 = vadd.f32 %v1284, 1.0
  %v1286 = vrcp.pop %v1285
  %v1287 = vmul.f32 1.0, %v1286
  %v1288 = vadd.f32 %v1121, %v1237
  %v1289 = vxor.u32 %v1288, 2147483648
  %v1290 = vmul.f32 %v1289, 1.442695
  %v1291 = vpow.pop %v1290
  %v1292 = vadd.f32 %v1291, 1.0
  %v1293 = vrcp.pop %v1292
  %v1294 = vmul.f32 1.0, %v1293
  %v1295 = vadd.f32 %v1276, %v39
  %v1296 = vmul.f32 %v1287, %v1295
  %v1297 = vadd.f32 %v1169, %v1296
  %v1298 = vtanh.pop %v1297
  %v1299 = vsub.f32 1.0, %v1294
  %v1300 = vmul.f32 %v1299, %v1298
  %v1301 = vmul.f32 %v1294, %v1195
  %v1302 = vadd.f32 %v1300, %v1301
  %v1303 = vpack.c.bf16 %v1302, %v1302
  %v1305 = vsel %vm78, %v1303, 0
  %1307 = vmatprep.subr.bf16.mxu0 %v211
  %1308 = vmatpush1.bf16.msra.mxu0 %v210
  %1309 = vmatprep.subr.bf16.mxu0 %v226
  %1310 = vmatpush1.bf16.msra.mxu0 %v223
  %1311 = vmatprep.subr.bf16.mxu0 0
  %1312 = vmatpush1.bf16.msra.mxu0 0
  %1313 = vmatprep.subr.bf16.mxu0 0
  %1314 = vmatpush1.bf16.msra.mxu0 0
  %1315 = vmatprep.subr.bf16.mxu0 0
  %1316 = vmatpush1.bf16.msra.mxu0 0
  %1317 = vmatprep.subr.bf16.mxu0 0
  %1318 = vmatpush1.bf16.msra.mxu0 0
  %1319 = vmatprep.subr.bf16.mxu0 0
  %1320 = vmatpush1.bf16.msra.mxu0 0
  %1321 = vmatprep.subr.bf16.mxu0 0
  %1322 = vmatpush1.bf16.msra.mxu0 0
  %1323 = vmatprep.subr.bf16.mxu0 0
  %1324 = vmatpush1.bf16.msra.mxu0 0
  %1325 = vmatprep.subr.bf16.mxu0 0
  %1326 = vmatpush1.bf16.msra.mxu0 0
  %1327 = vmatprep.subr.bf16.mxu0 0
  %1328 = vmatpush1.bf16.msra.mxu0 0
  %1329 = vmatprep.subr.bf16.mxu0 0
  %1330 = vmatpush1.bf16.msra.mxu0 0
  %1331 = vmatprep.subr.bf16.mxu0 0
  %1332 = vmatpush1.bf16.msra.mxu0 0
  %1333 = vmatprep.subr.bf16.mxu0 0
  %1334 = vmatpush1.bf16.msra.mxu0 0
  %1335 = vmatprep.subr.bf16.mxu0 0
  %1336 = vmatpush1.bf16.msra.mxu0 0
  %1337 = vmatprep.subr.bf16.mxu0 0
  %1338 = vmatpush1.bf16.msra.mxu0 0
  %1339 = vmatprep.mubr.bf16.mxu0 0
  %1340 = vmatmul.mubr.bf16.gmra.mrb[0].mxu0 %v1305
  %v1341 = vpop.f32.mrb[0].mxu0
  %v1342 = vadd.f32 0.0, %v1341
  %v1343 = vpop.f32.mrb[0].mxu0
  %v1344 = vadd.f32 0.0, %v1343
  %v1345 = vpop.f32.mrb[0].mxu0
  %v1346 = vpop.f32.mrb[0].mxu0
  %1347 = vdwg.mxu0
  %1348 = vmatprep.subr.bf16.mxu0 0
  %1349 = vmatpush1.bf16.msra.mxu0 %v212
  %1350 = vmatprep.subr.bf16.mxu0 0
  %1351 = vmatpush1.bf16.msra.mxu0 %v229
  %1352 = vmatprep.subr.bf16.mxu0 0
  %1353 = vmatpush1.bf16.msra.mxu0 0
  %1354 = vmatprep.subr.bf16.mxu0 0
  %1355 = vmatpush1.bf16.msra.mxu0 0
  %1356 = vmatprep.subr.bf16.mxu0 0
  %1357 = vmatpush1.bf16.msra.mxu0 0
  %1358 = vmatprep.subr.bf16.mxu0 0
  %1359 = vmatpush1.bf16.msra.mxu0 0
  %1360 = vmatprep.subr.bf16.mxu0 0
  %1361 = vmatpush1.bf16.msra.mxu0 0
  %1362 = vmatprep.subr.bf16.mxu0 0
  %1363 = vmatpush1.bf16.msra.mxu0 0
  %1364 = vmatprep.subr.bf16.mxu0 0
  %1365 = vmatpush1.bf16.msra.mxu0 0
  %1366 = vmatprep.subr.bf16.mxu0 0
  %1367 = vmatpush1.bf16.msra.mxu0 0
  %1368 = vmatprep.subr.bf16.mxu0 0
  %1369 = vmatpush1.bf16.msra.mxu0 0
  %1370 = vmatprep.subr.bf16.mxu0 0
  %1371 = vmatpush1.bf16.msra.mxu0 0
  %1372 = vmatprep.subr.bf16.mxu0 0
  %1373 = vmatpush1.bf16.msra.mxu0 0
  %1374 = vmatprep.subr.bf16.mxu0 0
  %1375 = vmatpush1.bf16.msra.mxu0 0
  %1376 = vmatprep.subr.bf16.mxu0 0
  %1377 = vmatpush1.bf16.msra.mxu0 0
  %1378 = vmatprep.subr.bf16.mxu0 0
  %1379 = vmatpush1.bf16.msra.mxu0 0
  %1380 = vmatprep.mubr.bf16.mxu0 0
  %1381 = vmatmul.mubr.bf16.gmra.mrb[0].mxu0 %v1305
  %v1382 = vpop.f32.mrb[0].mxu0
  %v1383 = vadd.f32 0.0, %v1382
  %v1384 = vpop.f32.mrb[0].mxu0
  %v1385 = vpop.f32.mrb[0].mxu0
  %v1386 = vpop.f32.mrb[0].mxu0
  %1387 = vdwg.mxu0
  %v1388 = vadd.f32 %v1125, %v1342
  %v1389 = vxor.u32 %v1388, 2147483648
  %v1390 = vmul.f32 %v1389, 1.442695
  %v1391 = vpow.pop %v1390
  %v1392 = vadd.f32 %v1391, 1.0
  %v1393 = vrcp.pop %v1392
  %v1394 = vmul.f32 1.0, %v1393
  %v1395 = vadd.f32 %v1127, %v1344
  %v1396 = vxor.u32 %v1395, 2147483648
  %v1397 = vmul.f32 %v1396, 1.442695
  %v1398 = vpow.pop %v1397
  %v1399 = vadd.f32 %v1398, 1.0
  %v1400 = vrcp.pop %v1399
  %v1401 = vmul.f32 1.0, %v1400
  %v1402 = vadd.f32 %v1383, %v39
  %v1403 = vmul.f32 %v1394, %v1402
  %v1404 = vadd.f32 %v1174, %v1403
  %v1405 = vtanh.pop %v1404
  %v1406 = vsub.f32 1.0, %v1401
  %v1407 = vmul.f32 %v1406, %v1405
  %v1408 = vmul.f32 %v1401, %v1302
  %v1409 = vadd.f32 %v1407, %v1408
  %v1410 = vpack.c.bf16 %v1302, %v1195
  %v1411 = vpack.c.bf16 %v1409, %v1409
  %v1413 = vsel %vm78, %v1410, 0
  %v1416 = vsel %vm78, %v1411, 0
  %1418 = vmatprep.subr.bf16.mxu0 %v596
  %1419 = vmatpush1.bf16.msra.mxu0 %v595
  %1420 = vmatprep.subr.bf16.mxu0 %v614
  %1421 = vmatpush1.bf16.msra.mxu0 %v611
  %1422 = vmatprep.subr.bf16.mxu0 0
  %1423 = vmatpush1.bf16.msra.mxu0 0
  %1424 = vmatprep.subr.bf16.mxu0 0
  %1425 = vmatpush1.bf16.msra.mxu0 0
  %1426 = vmatprep.subr.bf16.mxu0 0
  %1427 = vmatpush1.bf16.msra.mxu0 0
  %1428 = vmatprep.subr.bf16.mxu0 0
  %1429 = vmatpush1.bf16.msra.mxu0 0
  %1430 = vmatprep.subr.bf16.mxu0 0
  %1431 = vmatpush1.bf16.msra.mxu0 0
  %1432 = vmatprep.subr.bf16.mxu0 0
  %1433 = vmatpush1.bf16.msra.mxu0 0
  %1434 = vmatprep.subr.bf16.mxu0 0
  %1435 = vmatpush1.bf16.msra.mxu0 0
  %1436 = vmatprep.subr.bf16.mxu0 0
  %1437 = vmatpush1.bf16.msra.mxu0 0
  %1438 = vmatprep.subr.bf16.mxu0 0
  %1439 = vmatpush1.bf16.msra.mxu0 0
  %1440 = vmatprep.subr.bf16.mxu0 0
  %1441 = vmatpush1.bf16.msra.mxu0 0
  %1442 = vmatprep.subr.bf16.mxu0 0
  %1443 = vmatpush1.bf16.msra.mxu0 0
  %1444 = vmatprep.subr.bf16.mxu0 0
  %1445 = vmatpush1.bf16.msra.mxu0 0
  %1446 = vmatprep.subr.bf16.mxu0 0
  %1447 = vmatpush1.bf16.msra.mxu0 0
  %1448 = vmatprep.subr.bf16.mxu0 0
  %1449 = vmatpush1.bf16.msra.mxu0 0
  %1450 = vmatprep.mubr.bf16.mxu0 0
  %1451 = vmatmul.mubr.bf16.gmra.mrb[0].mxu0 %v1413
  %v1452 = vpop.f32.mrb[0].mxu0
  %v1453 = vadd.f32 %v571, %v1452
  %v1454 = vpop.f32.mrb[0].mxu0
  %v1455 = vadd.f32 %v575, %v1454
  %v1456 = vpop.f32.mrb[0].mxu0
  %v1457 = vadd.f32 %v571, %v1456
  %v1458 = vpop.f32.mrb[0].mxu0
  %v1459 = vadd.f32 %v575, %v1458
  %1460 = vmatprep.mubr.bf16.mxu0 0
  %1461 = vmatmul.mubr.bf16.gmra.mrb[0].mxu0 %v1416
  %v1462 = vpop.f32.mrb[0].mxu0
  %v1463 = vadd.f32 %v571, %v1462
  %v1464 = vpop.f32.mrb[0].mxu0
  %v1465 = vadd.f32 %v575, %v1464
  %v1466 = vpop.f32.mrb[0].mxu0
  %v1467 = vpop.f32.mrb[0].mxu0
  %1468 = vdwg.mxu0
  %1469 = vmatprep.subr.bf16.mxu0 0
  %1470 = vmatpush1.bf16.msra.mxu0 %v597
  %1471 = vmatprep.subr.bf16.mxu0 0
  %1472 = vmatpush1.bf16.msra.mxu0 %v617
  %1473 = vmatprep.subr.bf16.mxu0 0
  %1474 = vmatpush1.bf16.msra.mxu0 0
  %1475 = vmatprep.subr.bf16.mxu0 0
  %1476 = vmatpush1.bf16.msra.mxu0 0
  %1477 = vmatprep.subr.bf16.mxu0 0
  %1478 = vmatpush1.bf16.msra.mxu0 0
  %1479 = vmatprep.subr.bf16.mxu0 0
  %1480 = vmatpush1.bf16.msra.mxu0 0
  %1481 = vmatprep.subr.bf16.mxu0 0
  %1482 = vmatpush1.bf16.msra.mxu0 0
  %1483 = vmatprep.subr.bf16.mxu0 0
  %1484 = vmatpush1.bf16.msra.mxu0 0
  %1485 = vmatprep.subr.bf16.mxu0 0
  %1486 = vmatpush1.bf16.msra.mxu0 0
  %1487 = vmatprep.subr.bf16.mxu0 0
  %1488 = vmatpush1.bf16.msra.mxu0 0
  %1489 = vmatprep.subr.bf16.mxu0 0
  %1490 = vmatpush1.bf16.msra.mxu0 0
  %1491 = vmatprep.subr.bf16.mxu0 0
  %1492 = vmatpush1.bf16.msra.mxu0 0
  %1493 = vmatprep.subr.bf16.mxu0 0
  %1494 = vmatpush1.bf16.msra.mxu0 0
  %1495 = vmatprep.subr.bf16.mxu0 0
  %1496 = vmatpush1.bf16.msra.mxu0 0
  %1497 = vmatprep.subr.bf16.mxu0 0
  %1498 = vmatpush1.bf16.msra.mxu0 0
  %1499 = vmatprep.subr.bf16.mxu0 0
  %1500 = vmatpush1.bf16.msra.mxu0 0
  %1501 = vmatprep.mubr.bf16.mxu0 0
  %1502 = vmatmul.mubr.bf16.gmra.mrb[0].mxu0 %v1413
  %v1503 = vpop.f32.mrb[0].mxu0
  %v1504 = vadd.f32 %v579, %v1503
  %v1505 = vpop.f32.mrb[0].mxu0
  %v1506 = vpop.f32.mrb[0].mxu0
  %v1507 = vadd.f32 %v579, %v1506
  %v1508 = vpop.f32.mrb[0].mxu0
  %1509 = vmatprep.mubr.bf16.mxu0 0
  %1510 = vmatmul.mubr.bf16.gmra.mrb[0].mxu0 %v1416
  %v1511 = vpop.f32.mrb[0].mxu0
  %v1512 = vadd.f32 %v579, %v1511
  %v1513 = vpop.f32.mrb[0].mxu0
  %v1514 = vpop.f32.mrb[0].mxu0
  %v1515 = vpop.f32.mrb[0].mxu0
  %1516 = vdwg.mxu0
  %v1517 = vxor.u32 %v1453, 2147483648
  %v1518 = vmul.f32 %v1517, 1.442695
  %v1519 = vpow.pop %v1518
  %v1520 = vadd.f32 %v1519, 1.0
  %v1521 = vrcp.pop %v1520
  %v1522 = vmul.f32 1.0, %v1521
  %v1523 = vxor.u32 %v1455, 2147483648
  %v1524 = vmul.f32 %v1523, 1.442695
  %v1525 = vpow.pop %v1524
  %v1526 = vadd.f32 %v1525, 1.0
  %v1527 = vrcp.pop %v1526
  %v1528 = vmul.f32 1.0, %v1527
  %v1529 = vmul.f32 %v1522, %v565
  %v1530 = vadd.f32 %v1504, %v1529
  %v1531 = vtanh.pop %v1530
  %v1532 = vsub.f32 1.0, %v1528
  %v1533 = vmul.f32 %v1532, %v1531
  %v1534 = vpack.c.bf16 %v1533, %v1533
  %v1536 = vsel %vm78, %v1534, 0
  %1538 = vmatprep.subr.bf16.mxu0 %v735
  %1539 = vmatpush1.bf16.msra.mxu0 %v734
  %1540 = vmatprep.subr.bf16.mxu0 %v750
  %1541 = vmatpush1.bf16.msra.mxu0 %v747
  %1542 = vmatprep.subr.bf16.mxu0 0
  %1543 = vmatpush1.bf16.msra.mxu0 0
  %1544 = vmatprep.subr.bf16.mxu0 0
  %1545 = vmatpush1.bf16.msra.mxu0 0
  %1546 = vmatprep.subr.bf16.mxu0 0
  %1547 = vmatpush1.bf16.msra.mxu0 0
  %1548 = vmatprep.subr.bf16.mxu0 0
  %1549 = vmatpush1.bf16.msra.mxu0 0
  %1550 = vmatprep.subr.bf16.mxu0 0
  %1551 = vmatpush1.bf16.msra.mxu0 0
  %1552 = vmatprep.subr.bf16.mxu0 0
  %1553 = vmatpush1.bf16.msra.mxu0 0
  %1554 = vmatprep.subr.bf16.mxu0 0
  %1555 = vmatpush1.bf16.msra.mxu0 0
  %1556 = vmatprep.subr.bf16.mxu0 0
  %1557 = vmatpush1.bf16.msra.mxu0 0
  %1558 = vmatprep.subr.bf16.mxu0 0
  %1559 = vmatpush1.bf16.msra.mxu0 0
  %1560 = vmatprep.subr.bf16.mxu0 0
  %1561 = vmatpush1.bf16.msra.mxu0 0
  %1562 = vmatprep.subr.bf16.mxu0 0
  %1563 = vmatpush1.bf16.msra.mxu0 0
  %1564 = vmatprep.subr.bf16.mxu0 0
  %1565 = vmatpush1.bf16.msra.mxu0 0
  %1566 = vmatprep.subr.bf16.mxu0 0
  %1567 = vmatpush1.bf16.msra.mxu0 0
  %1568 = vmatprep.subr.bf16.mxu0 0
  %1569 = vmatpush1.bf16.msra.mxu0 0
  %1570 = vmatprep.mubr.bf16.mxu0 0
  %1571 = vmatmul.mubr.bf16.gmra.mrb[0].mxu0 %v1536
  %v1572 = vpop.f32.mrb[0].mxu0
  %v1573 = vadd.f32 0.0, %v1572
  %v1574 = vpop.f32.mrb[0].mxu0
  %v1575 = vadd.f32 0.0, %v1574
  %v1576 = vpop.f32.mrb[0].mxu0
  %v1577 = vpop.f32.mrb[0].mxu0
  %1578 = vdwg.mxu0
  %1579 = vmatprep.subr.bf16.mxu0 0
  %1580 = vmatpush1.bf16.msra.mxu0 %v736
  %1581 = vmatprep.subr.bf16.mxu0 0
  %1582 = vmatpush1.bf16.msra.mxu0 %v753
  %1583 = vmatprep.subr.bf16.mxu0 0
  %1584 = vmatpush1.bf16.msra.mxu0 0
  %1585 = vmatprep.subr.bf16.mxu0 0
  %1586 = vmatpush1.bf16.msra.mxu0 0
  %1587 = vmatprep.subr.bf16.mxu0 0
  %1588 = vmatpush1.bf16.msra.mxu0 0
  %1589 = vmatprep.subr.bf16.mxu0 0
  %1590 = vmatpush1.bf16.msra.mxu0 0
  %1591 = vmatprep.subr.bf16.mxu0 0
  %1592 = vmatpush1.bf16.msra.mxu0 0
  %1593 = vmatprep.subr.bf16.mxu0 0
  %1594 = vmatpush1.bf16.msra.mxu0 0
  %1595 = vmatprep.subr.bf16.mxu0 0
  %1596 = vmatpush1.bf16.msra.mxu0 0
  %1597 = vmatprep.subr.bf16.mxu0 0
  %1598 = vmatpush1.bf16.msra.mxu0 0
  %1599 = vmatprep.subr.bf16.mxu0 0
  %1600 = vmatpush1.bf16.msra.mxu0 0
  %1601 = vmatprep.subr.bf16.mxu0 0
  %1602 = vmatpush1.bf16.msra.mxu0 0
  %1603 = vmatprep.subr.bf16.mxu0 0
  %1604 = vmatpush1.bf16.msra.mxu0 0
  %1605 = vmatprep.subr.bf16.mxu0 0
  %1606 = vmatpush1.bf16.msra.mxu0 0
  %1607 = vmatprep.subr.bf16.mxu0 0
  %1608 = vmatpush1.bf16.msra.mxu0 0
  %1609 = vmatprep.subr.bf16.mxu0 0
  %1610 = vmatpush1.bf16.msra.mxu0 0
  %1611 = vmatprep.mubr.bf16.mxu0 0
  %1612 = vmatmul.mubr.bf16.gmra.mrb[0].mxu0 %v1536
  %v1613 = vpop.f32.mrb[0].mxu0
  %v1614 = vadd.f32 0.0, %v1613
  %v1615 = vpop.f32.mrb[0].mxu0
  %v1616 = vpop.f32.mrb[0].mxu0
  %v1617 = vpop.f32.mrb[0].mxu0
  %1618 = vdwg.mxu0
  %v1619 = vadd.f32 %v1457, %v1573
  %v1620 = vxor.u32 %v1619, 2147483648
  %v1621 = vmul.f32 %v1620, 1.442695
  %v1622 = vpow.pop %v1621
  %v1623 = vadd.f32 %v1622, 1.0
  %v1624 = vrcp.pop %v1623
  %v1625 = vmul.f32 1.0, %v1624
  %v1626 = vadd.f32 %v1459, %v1575
  %v1627 = vxor.u32 %v1626, 2147483648
  %v1628 = vmul.f32 %v1627, 1.442695
  %v1629 = vpow.pop %v1628
  %v1630 = vadd.f32 %v1629, 1.0
  %v1631 = vrcp.pop %v1630
  %v1632 = vmul.f32 1.0, %v1631
  %v1633 = vadd.f32 %v1614, %v565
  %v1634 = vmul.f32 %v1625, %v1633
  %v1635 = vadd.f32 %v1507, %v1634
  %v1636 = vtanh.pop %v1635
  %v1637 = vsub.f32 1.0, %v1632
  %v1638 = vmul.f32 %v1637, %v1636
  %v1639 = vmul.f32 %v1632, %v1533
  %v1640 = vadd.f32 %v1638, %v1639
  %v1641 = vpack.c.bf16 %v1640, %v1640
  %v1643 = vsel %vm78, %v1641, 0
  %1645 = vmatprep.subr.bf16.mxu0 %v735
  %1646 = vmatpush1.bf16.msra.mxu0 %v734
  %1647 = vmatprep.subr.bf16.mxu0 %v750
  %1648 = vmatpush1.bf16.msra.mxu0 %v747
  %1649 = vmatprep.subr.bf16.mxu0 0
  %1650 = vmatpush1.bf16.msra.mxu0 0
  %1651 = vmatprep.subr.bf16.mxu0 0
  %1652 = vmatpush1.bf16.msra.mxu0 0
  %1653 = vmatprep.subr.bf16.mxu0 0
  %1654 = vmatpush1.bf16.msra.mxu0 0
  %1655 = vmatprep.subr.bf16.mxu0 0
  %1656 = vmatpush1.bf16.msra.mxu0 0
  %1657 = vmatprep.subr.bf16.mxu0 0
  %1658 = vmatpush1.bf16.msra.mxu0 0
  %1659 = vmatprep.subr.bf16.mxu0 0
  %1660 = vmatpush1.bf16.msra.mxu0 0
  %1661 = vmatprep.subr.bf16.mxu0 0
  %1662 = vmatpush1.bf16.msra.mxu0 0
  %1663 = vmatprep.subr.bf16.mxu0 0
  %1664 = vmatpush1.bf16.msra.mxu0 0
  %1665 = vmatprep.subr.bf16.mxu0 0
  %1666 = vmatpush1.bf16.msra.mxu0 0
  %1667 = vmatprep.subr.bf16.mxu0 0
  %1668 = vmatpush1.bf16.msra.mxu0 0
  %1669 = vmatprep.subr.bf16.mxu0 0
  %1670 = vmatpush1.bf16.msra.mxu0 0
  %1671 = vmatprep.subr.bf16.mxu0 0
  %1672 = vmatpush1.bf16.msra.mxu0 0
  %1673 = vmatprep.subr.bf16.mxu0 0
  %1674 = vmatpush1.bf16.msra.mxu0 0
  %1675 = vmatprep.subr.bf16.mxu0 0
  %1676 = vmatpush1.bf16.msra.mxu0 0
  %1677 = vmatprep.mubr.bf16.mxu0 0
  %1678 = vmatmul.mubr.bf16.gmra.mrb[0].mxu0 %v1643
  %v1679 = vpop.f32.mrb[0].mxu0
  %v1680 = vadd.f32 0.0, %v1679
  %v1681 = vpop.f32.mrb[0].mxu0
  %v1682 = vadd.f32 0.0, %v1681
  %v1683 = vpop.f32.mrb[0].mxu0
  %v1684 = vpop.f32.mrb[0].mxu0
  %1685 = vdwg.mxu0
  %1686 = vmatprep.subr.bf16.mxu0 0
  %1687 = vmatpush1.bf16.msra.mxu0 %v736
  %1688 = vmatprep.subr.bf16.mxu0 0
  %1689 = vmatpush1.bf16.msra.mxu0 %v753
  %1690 = vmatprep.subr.bf16.mxu0 0
  %1691 = vmatpush1.bf16.msra.mxu0 0
  %1692 = vmatprep.subr.bf16.mxu0 0
  %1693 = vmatpush1.bf16.msra.mxu0 0
  %1694 = vmatprep.subr.bf16.mxu0 0
  %1695 = vmatpush1.bf16.msra.mxu0 0
  %1696 = vmatprep.subr.bf16.mxu0 0
  %1697 = vmatpush1.bf16.msra.mxu0 0
  %1698 = vmatprep.subr.bf16.mxu0 0
  %1699 = vmatpush1.bf16.msra.mxu0 0
  %1700 = vmatprep.subr.bf16.mxu0 0
  %1701 = vmatpush1.bf16.msra.mxu0 0
  %1702 = vmatprep.subr.bf16.mxu0 0
  %1703 = vmatpush1.bf16.msra.mxu0 0
  %1704 = vmatprep.subr.bf16.mxu0 0
  %1705 = vmatpush1.bf16.msra.mxu0 0
  %1706 = vmatprep.subr.bf16.mxu0 0
  %1707 = vmatpush1.bf16.msra.mxu0 0
  %1708 = vmatprep.subr.bf16.mxu0 0
  %1709 = vmatpush1.bf16.msra.mxu0 0
  %1710 = vmatprep.subr.bf16.mxu0 0
  %1711 = vmatpush1.bf16.msra.mxu0 0
  %1712 = vmatprep.subr.bf16.mxu0 0
  %1713 = vmatpush1.bf16.msra.mxu0 0
  %1714 = vmatprep.subr.bf16.mxu0 0
  %1715 = vmatpush1.bf16.msra.mxu0 0
  %1716 = vmatprep.subr.bf16.mxu0 0
  %1717 = vmatpush1.bf16.msra.mxu0 0
  %1718 = vmatprep.mubr.bf16.mxu0 0
  %1719 = vmatmul.mubr.bf16.gmra.mrb[0].mxu0 %v1643
  %v1720 = vpop.f32.mrb[0].mxu0
  %v1721 = vadd.f32 0.0, %v1720
  %v1722 = vpop.f32.mrb[0].mxu0
  %v1723 = vpop.f32.mrb[0].mxu0
  %v1724 = vpop.f32.mrb[0].mxu0
  %1725 = vdwg.mxu0
  %v1726 = vadd.f32 %v1463, %v1680
  %v1727 = vxor.u32 %v1726, 2147483648
  %v1728 = vmul.f32 %v1727, 1.442695
  %v1729 = vpow.pop %v1728
  %v1730 = vadd.f32 %v1729, 1.0
  %v1731 = vrcp.pop %v1730
  %v1732 = vmul.f32 1.0, %v1731
  %v1733 = vadd.f32 %v1465, %v1682
  %v1734 = vxor.u32 %v1733, 2147483648
  %v1735 = vmul.f32 %v1734, 1.442695
  %v1736 = vpow.pop %v1735
  %v1737 = vadd.f32 %v1736, 1.0
  %v1738 = vrcp.pop %v1737
  %v1739 = vmul.f32 1.0, %v1738
  %v1740 = vadd.f32 %v1721, %v565
  %v1741 = vmul.f32 %v1732, %v1740
  %v1742 = vadd.f32 %v1512, %v1741
  %v1743 = vtanh.pop %v1742
  %v1744 = vsub.f32 1.0, %v1739
  %v1745 = vmul.f32 %v1744, %v1743
  %v1746 = vmul.f32 %v1739, %v1640
  %v1747 = vadd.f32 %v1745, %v1746
  %v1748 = vlaneseq
  %v1749 = vshrl.u32 %v1748, 7
  %v1750 = vsub.s32 4, %v1749
  %v1751 = vrot.slane %v15, %v1750
  %v1752 = vmul.f32 %v1747, %v1751
  %vm1753 = vcmask 159744
  %v1754 = vsel %vm1753, %v1752, 0.0
  %1755 = vadd.xlane.f32.xlu0 %v1754
  %v1756 = vpop.xlane.xlu0 %1755
  %v1757 = vlaneseq
  %v1758 = vshrl.u32 %v1757, 7
  %v1759 = vsub.s32 5, %v1758
  %v1760 = vrot.slane %v15, %v1759
  %v1761 = vadd.f32 %v1756, %v1760
  %vm1762 = vcmask 4096
  %1763 = vst.msk [vmem:[%s3] sm:$0x1f] %vm1762, %v1761
  // Predicated region
  $region14: #{time_series_prediction_forward.3} parent=0 // pred_check
    _
  $region15: #{time_series_prediction_forward.3} parent=0 // pred_check_branch
    %1765 = sbr.rel (0) target = $region17
  $region16: #{time_series_prediction_forward.3} parent=0 // pred_region
    _
  $region17: #{time_series_prediction_forward.3} parent=0 // pred_fallthru
    _
  // Predicated region
  $region18: #{time_series_prediction_forward.3} parent=0 // pred_check
    _
  $region19: #{time_series_prediction_forward.3} parent=0 // pred_check_branch
    %1767 = sbr.rel (0) target = $region21
  $region20: #{time_series_prediction_forward.3} parent=0 // pred_region
    _
  $region21: #{time_series_prediction_forward.3} parent=0 // pred_fallthru
    _

</llo_original>
